<compile_context>
chip_gen: v5e
topology: v5e:2x2
jax: 0.10.0
libtpu: 0.0.40
codegen_flags: <defaults>
</compile_context>

<pallas_src>
import functools
import math

import jax
import jax.numpy as jnp
from jax.experimental import pallas as pl
from jax.experimental.pallas import tpu as pltpu

EPS = 1e-6


def _rmsnorm(x, w):
    # x: (rows, D) fp32, w: (1, D) fp32
    ms = jnp.mean(x * x, axis=-1, keepdims=True)
    return x * jax.lax.rsqrt(ms + EPS) * w


def _block_kernel(n_heads, Tp,
                  x_ref, pe_ref, wqkv_ref, wproj_ref, n1_ref, n2_ref,
                  w13_ref, w2_ref, out_ref, y_ref):
    Bb, T, D = x_ref.shape
    hd = D // n_heads
    H = w2_ref.shape[0]
    mxu_dt = wqkv_ref.dtype  # bf16 (weights pre-cast once in prepare_block_params)

    # ---- fused positional-embedding add (VPU, hidden under the qkv matmul)
    x = x_ref[...].astype(jnp.float32)                     # (Bb, T, D) residual stream
    pe = pe_ref[...].astype(jnp.float32)                   # (Bb, Tp, D)
    if Tp == T:
        x = x + pe
    else:
        x = x.at[:, :Tp, :].add(pe)                        # static partial-length add
    rows = x.reshape(Bb * T, D)

    # ---- norm1 + fused qkv projection over all Bb*T rows (bf16 MXU, fp32 accumulation)
    h = _rmsnorm(rows, n1_ref[...]).astype(mxu_dt)
    qkv = jnp.dot(h, wqkv_ref[...], preferred_element_type=jnp.float32)   # (Bb*T, 3D)
    qkv = qkv.reshape(Bb, T, 3 * D)

    # ---- attention: per-head (static loop), batched over Bb via einsum.
    #      1/sqrt(hd) is already folded into the Q columns of wqkv.
    for hh in range(n_heads):
        sl = slice(hh * hd, (hh + 1) * hd)
        qh = qkv[:, :, 0 * D + hh * hd:0 * D + (hh + 1) * hd].astype(mxu_dt)
        kh = qkv[:, :, 1 * D + hh * hd:1 * D + (hh + 1) * hd].astype(mxu_dt)
        vh = qkv[:, :, 2 * D + hh * hd:2 * D + (hh + 1) * hd].astype(mxu_dt)

        s = jnp.einsum('bqd,bkd->bqk', qh, kh,
                       preferred_element_type=jnp.float32)                # (Bb, T, T)
        s = s - jnp.max(s, axis=-1, keepdims=True)
        p = jnp.exp(s)
        l = jnp.sum(p, axis=-1, keepdims=True)                            # (Bb, T, 1)
        yh = jnp.einsum('bqk,bkd->bqd', p.astype(mxu_dt), vh,
                        preferred_element_type=jnp.float32)               # (Bb, T, hd)
        # deferred softmax normalization; ~12-bit EUP reciprocal is plenty for bf16 output
        y_ref[:, :, sl] = (yh * pl.reciprocal(l, approx=True)).astype(y_ref.dtype)

    y = y_ref[...].reshape(Bb * T, D)                                     # bf16 already
    attn = jnp.dot(y, wproj_ref[...], preferred_element_type=jnp.float32)
    rows = rows + attn                                                    # residual 1

    # ---- norm2 + SwiGLU feed-forward: w2(silu(w1(x)) * w3(x)), w1/w3 fused as (D, 2H)
    h2 = _rmsnorm(rows, n2_ref[...]).astype(mxu_dt)
    gu = jnp.dot(h2, w13_ref[...], preferred_element_type=jnp.float32)    # (Bb*T, 2H)
    g = gu[:, :H]
    u = gu[:, H:]
    act = (g * jax.nn.sigmoid(g)) * u
    ff = jnp.dot(act.astype(mxu_dt), w2_ref[...], preferred_element_type=jnp.float32)
    rows = rows + ff                                                      # residual 2

    out_ref[...] = rows.reshape(Bb, T, D).astype(out_ref.dtype)


def prepare_block_params(params, n_heads):
    """One-time weight prep (call at init, not per forward): bf16 cast, attention scale
    folded into the Q columns of the fused qkv weight, w1/w3 fused into one weight."""
    D = params["wqkv"].shape[0]
    hd = D // n_heads
    wdt = jnp.bfloat16
    wqkv = params["wqkv"].at[:, :D].multiply(1.0 / math.sqrt(hd)).astype(wdt)
    return {
        "wqkv": wqkv,                                                    # (D, 3D)
        "wproj": params["wproj"].astype(wdt),                            # (D, D)
        "w13": jnp.concatenate([params["w1"], params["w3"]], 1).astype(wdt),  # (D, 2H)
        "w2": params["w2"].astype(wdt),                                  # (H, D)
        "norm1": params["norm1"].astype(jnp.float32),                    # (1, D)
        "norm2": params["norm2"].astype(jnp.float32),                    # (1, D)
    }


def _vmem_limit_bytes():
    try:
        info = pltpu.get_tpu_info()
        phys = int(getattr(info, "vmem_capacity_bytes", 64 << 20))
    except Exception:
        phys = 64 << 20
    # ~96-100 MiB on v5e/v6e (128 MiB physical), ~48 MiB on v7x (64 MiB physical)
    return min(int(0.75 * phys), 100 << 20)


def block_forward(x, pe, prepared, n_heads, *, batch_block=None):
    B, T, D = x.shape
    Tp = pe.shape[1]
    H = prepared["w2"].shape[0]
    assert D % n_heads == 0
    assert Tp <= T

    vmem_limit = _vmem_limit_bytes()

    # resident weights (bf16, default double-buffered)
    weight_bytes = 2 * 2 * (D * 3 * D + D * D + D * 2 * H + H * D) + 2 * 2 * D * 4

    def tile_bytes(bb):
        act = bb * T * D * 4
        return (2 * act                              # x input tile, double-buffered
                + 2 * bb * Tp * D * 4                # pe input tile
                + 2 * bb * T * D * x.dtype.itemsize  # output tile
                + bb * T * D * 2                     # bf16 attention scratch
                + bb * T * 3 * D * 4                 # fp32 qkv intermediate
                + 3 * bb * T * T * 4                 # scores / exp / softmax temps
                + bb * T * 2 * H * 4                 # fused gate/up fp32
                + 3 * act)                           # rows / norm / ff fp32 temporaries

    budget = vmem_limit - weight_bytes - (4 << 20)   # headroom for compiler scratch

    if batch_block is None:
        # keep >= 2 grid steps when B >= 2 so v7x can shard the batch axis over both TCs
        max_bb = B if B < 2 else max(1, B // 2)
        candidates = [bb for bb in range(1, max_bb + 1)
                      if B % bb == 0 and tile_bytes(bb) <= budget]
        if not candidates:
            raise NotImplementedError(
                "activation tiles do not fit VMEM; needs the flash-style T tiling "
                "(see TODO(synk) at top of file)")
        # prefer the smallest Bb that still feeds the MXU >= 256 rows (keeps grid long);
        # otherwise take the largest Bb that fits (amortize per-step overhead).
        good = [bb for bb in candidates if bb * T >= 256]
        batch_block = min(good) if good else max(candidates)
    Bb = batch_block
    assert B % Bb == 0

    kernel = functools.partial(_block_kernel, n_heads, Tp)
    const = lambda shape: pl.BlockSpec(shape, lambda b: tuple(0 for _ in shape))

    return pl.pallas_call(
        kernel,
        out_shape=jax.ShapeDtypeStruct((B, T, D), x.dtype),
        grid_spec=pltpu.PrefetchScalarGridSpec(
            num_scalar_prefetch=0,
            grid=(B // Bb,),
            in_specs=[
                pl.BlockSpec((Bb, T, D), lambda b: (b, 0, 0)),    # x
                pl.BlockSpec((Bb, Tp, D), lambda b: (b, 0, 0)),   # pe (fused add in kernel)
                const((D, 3 * D)),                                # W_qkv^T (Q cols pre-scaled)
                const((D, D)),                                    # W_proj^T
                const((1, D)),                                    # norm1 weight
                const((1, D)),                                    # norm2 weight
                const((D, 2 * H)),                                # [w1 | w3]^T fused
                const((H, D)),                                    # w2^T
            ],
            out_specs=pl.BlockSpec((Bb, T, D), lambda b: (b, 0, 0)),
            scratch_shapes=[pltpu.VMEM((Bb, T, D), jnp.bfloat16)],   # per-head attn output
        ),
        compiler_params=pltpu.CompilerParams(
            dimension_semantics=("parallel",),
            vmem_limit_bytes=vmem_limit,
        ),
    )(x, pe, prepared["wqkv"], prepared["wproj"], prepared["norm1"], prepared["norm2"],
      prepared["w13"], prepared["w2"])


def block_reference(x, pe, params, n_heads):
    """Pure-JAX fp32 reference matching the PyTorch module (eval mode)."""
    B, T, D = x.shape
    Tp = pe.shape[1]
    hd = D // n_heads
    x = x.at[:, :Tp, :].add(pe)

    def rms(v, w):
        vf = v.astype(jnp.float32)
        return (vf * jax.lax.rsqrt(jnp.mean(vf * vf, -1, keepdims=True) + EPS)).astype(v.dtype) * w

    h = rms(x, params["norm1"][0])
    qkv = h @ params["wqkv"]
    q, k, v = jnp.split(qkv, 3, axis=-1)
    q = q.reshape(B, T, n_heads, hd).transpose(0, 2, 1, 3)
    k = k.reshape(B, T, n_heads, hd).transpose(0, 2, 1, 3)
    v = v.reshape(B, T, n_heads, hd).transpose(0, 2, 1, 3)
    s = jnp.einsum("bhqd,bhkd->bhqk", q, k) / math.sqrt(hd)
    p = jax.nn.softmax(s, axis=-1)
    y = jnp.einsum("bhqk,bhkd->bhqd", p, v).transpose(0, 2, 1, 3).reshape(B, T, D)
    x = x + y @ params["wproj"]

    h2 = rms(x, params["norm2"][0])
    g = h2 @ params["w1"]
    u = h2 @ params["w3"]
    return x + (g * jax.nn.sigmoid(g) * u) @ params["w2"]


def make_params(key, embedding_dim, mlp_dim):
    # FeedForward hidden-dim rule from the module
    hidden = int(2 * mlp_dim / 3)
    hidden = 128 * ((hidden + 128 - 1) // 128)
    ks = jax.random.split(key, 5)
    scale = 0.02
    return {
        "wqkv": scale * jax.random.normal(ks[0], (embedding_dim, 3 * embedding_dim), jnp.float32),
        "wproj": scale * jax.random.normal(ks[1], (embedding_dim, embedding_dim), jnp.float32),
        "norm1": jnp.ones((1, embedding_dim), jnp.float32),
        "norm2": jnp.ones((1, embedding_dim), jnp.float32),
        "w1": scale * jax.random.normal(ks[2], (embedding_dim, hidden), jnp.float32),
        "w3": scale * jax.random.normal(ks[3], (embedding_dim, hidden), jnp.float32),
        "w2": scale * jax.random.normal(ks[4], (hidden, embedding_dim), jnp.float32),
    }


if __name__ == "__main__":
    B, T, D = 2, 8, 256
    n_heads = 2          # head_dim = 128 (lane-aligned)
    mlp_dim = 384        # -> hidden = 256 after the module's rounding rule

    key = jax.random.PRNGKey(0)
    kx, kpe, kp = jax.random.split(key, 3)
    x = jax.random.normal(kx, (B, T, D), jnp.float32)
    pe = jax.random.normal(kpe, (B, T, D), jnp.float32)
    params = make_params(kp, D, mlp_dim)

    # one-time weight preparation (hoisted out of the forward path)
    prepared = prepare_block_params(params, n_heads)

    out = block_forward(x, pe, prepared, n_heads)
    out = jax.block_until_ready(out)

    ref = block_reference(x, pe, params, n_heads)
    assert out.shape == (B, T, D)
    # bf16 MXU operands + approximate softmax reciprocal -> relaxed (bf16-tight) tolerance
    assert jnp.allclose(out, ref, atol=3e-2, rtol=3e-2), "mismatch vs JAX reference"

    print("KERNEL_OK")
</pallas_src>

<mosaic_0001>
module attributes {stable_mosaic.version = 11 : i64} {
  func.func @_block_kernel(%arg0: i32, %arg1: memref<1x8x256xf32, #tpu.memory_space<vmem>>, %arg2: memref<1x8x256xf32, #tpu.memory_space<vmem>>, %arg3: memref<256x768xbf16, #tpu.memory_space<vmem>>, %arg4: memref<256x256xbf16, #tpu.memory_space<vmem>>, %arg5: memref<1x256xf32, #tpu.memory_space<vmem>>, %arg6: memref<1x256xf32, #tpu.memory_space<vmem>>, %arg7: memref<256x512xbf16, #tpu.memory_space<vmem>>, %arg8: memref<256x256xbf16, #tpu.memory_space<vmem>>, %arg9: memref<1x8x256xf32, #tpu.memory_space<vmem>>, %arg10: memref<1x8x256xbf16, #tpu.memory_space<vmem>>) attributes {dimension_semantics = [#tpu.dimension_semantics<parallel>], iteration_bounds = array<i64: 2>, scalar_prefetch = 0 : i64, scratch_operands = 1 : i64, tpu.core_type = #tpu.core_type<tc>, window_params = [{transform_indices = @transform_0, window_bounds = array<i64: 1, 8, 256>}, {transform_indices = @transform_1, window_bounds = array<i64: 1, 8, 256>}, {pipeline_mode = #tpu.pipeline_mode<synchronous>, transform_indices = @transform_2, window_bounds = array<i64: 256, 768>}, {pipeline_mode = #tpu.pipeline_mode<synchronous>, transform_indices = @transform_3, window_bounds = array<i64: 256, 256>}, {pipeline_mode = #tpu.pipeline_mode<synchronous>, transform_indices = @transform_4, window_bounds = array<i64: 1, 256>}, {pipeline_mode = #tpu.pipeline_mode<synchronous>, transform_indices = @transform_5, window_bounds = array<i64: 1, 256>}, {pipeline_mode = #tpu.pipeline_mode<synchronous>, transform_indices = @transform_6, window_bounds = array<i64: 256, 512>}, {pipeline_mode = #tpu.pipeline_mode<synchronous>, transform_indices = @transform_7, window_bounds = array<i64: 256, 256>}, {transform_indices = @transform_8, window_bounds = array<i64: 1, 8, 256>}]} {
    %c0 = arith.constant 0 : index
    %c0_0 = arith.constant 0 : index
    %c0_1 = arith.constant 0 : index
    %0 = vector.load %arg1[%c0, %c0_0, %c0_1] : memref<1x8x256xf32, #tpu.memory_space<vmem>>, vector<1x8x256xf32>
    %c0_2 = arith.constant 0 : index
    %c0_3 = arith.constant 0 : index
    %c0_4 = arith.constant 0 : index
    %1 = vector.load %arg2[%c0_2, %c0_3, %c0_4] : memref<1x8x256xf32, #tpu.memory_space<vmem>>, vector<1x8x256xf32>
    %2 = arith.addf %0, %1 : vector<1x8x256xf32>
    %3 = vector.shape_cast %2 : vector<1x8x256xf32> to vector<8x256xf32>
    %c0_5 = arith.constant 0 : index
    %c0_6 = arith.constant 0 : index
    %4 = vector.load %arg5[%c0_5, %c0_6] : memref<1x256xf32, #tpu.memory_space<vmem>>, vector<1x256xf32>
    %5 = arith.mulf %3, %3 : vector<8x256xf32>
    %cst = arith.constant dense<0.000000e+00> : vector<8xf32>
    %6 = vector.multi_reduction <add>, %5, %cst [1] : vector<8x256xf32> to vector<8xf32>
    %7 = vector.shape_cast %6 : vector<8xf32> to vector<8x1xf32>
    %cst_7 = arith.constant 2.560000e+02 : f32
    %8 = vector.broadcast %cst_7 : f32 to vector<8x1xf32>
    %9 = arith.divf %7, %8 : vector<8x1xf32>
    %cst_8 = arith.constant 9.99999997E-7 : f32
    %10 = vector.broadcast %cst_8 : f32 to vector<8x1xf32>
    %11 = arith.addf %9, %10 : vector<8x1xf32>
    %12 = math.rsqrt %11 : vector<8x1xf32>
    %13 = vector.broadcast %12 : vector<8x1xf32> to vector<8x256xf32>
    %14 = arith.mulf %3, %13 : vector<8x256xf32>
    %15 = vector.broadcast %4 : vector<1x256xf32> to vector<8x256xf32>
    %16 = arith.mulf %14, %15 : vector<8x256xf32>
    %17 = arith.truncf %16 : vector<8x256xf32> to vector<8x256xbf16>
    %c0_9 = arith.constant 0 : index
    %c0_10 = arith.constant 0 : index
    %18 = vector.load %arg3[%c0_9, %c0_10] : memref<256x768xbf16, #tpu.memory_space<vmem>>, vector<256x768xbf16>
    %cst_11 = arith.constant dense<0.000000e+00> : vector<8x768xf32>
    %19 = tpu.matmul %17, %18, %cst_11 {dimension_numbers = #tpu.dot_dimension_numbers<[1], [0], [0], [1], [0, 0, 1, 1], [], []>} : vector<8x256xbf16>, vector<256x768xbf16>, vector<8x768xf32> -> vector<8x768xf32>
    %20 = vector.shape_cast %19 : vector<8x768xf32> to vector<1x8x768xf32>
    %21 = vector.extract_strided_slice %20 {offsets = [0, 0, 0], sizes = [1, 8, 128], strides = [1, 1, 1]} : vector<1x8x768xf32> to vector<1x8x128xf32>
    %22 = arith.truncf %21 : vector<1x8x128xf32> to vector<1x8x128xbf16>
    %23 = vector.extract_strided_slice %20 {offsets = [0, 0, 256], sizes = [1, 8, 128], strides = [1, 1, 1]} : vector<1x8x768xf32> to vector<1x8x128xf32>
    %24 = arith.truncf %23 : vector<1x8x128xf32> to vector<1x8x128xbf16>
    %25 = vector.extract_strided_slice %20 {offsets = [0, 0, 512], sizes = [1, 8, 128], strides = [1, 1, 1]} : vector<1x8x768xf32> to vector<1x8x128xf32>
    %26 = arith.truncf %25 : vector<1x8x128xf32> to vector<1x8x128xbf16>
    "tpu.trace_start"() <{level = 10 : i32, message = "bqd,bkd->bqk"}> : () -> ()
    %cst_12 = arith.constant dense<0.000000e+00> : vector<1x8x8xf32>
    %27 = tpu.matmul %22, %24, %cst_12 {dimension_numbers = #tpu.dot_dimension_numbers<[2], [2], [1], [1], [0, 0, 0, 1, 1, 1], [0], [0]>} : vector<1x8x128xbf16>, vector<1x8x128xbf16>, vector<1x8x8xf32> -> vector<1x8x8xf32>
    "tpu.trace_stop"() : () -> ()
    %cst_13 = arith.constant dense<0xFF800000> : vector<1x8xf32>
    %28 = vector.multi_reduction <maximumf>, %27, %cst_13 [2] : vector<1x8x8xf32> to vector<1x8xf32>
    %29 = vector.shape_cast %28 : vector<1x8xf32> to vector<1x8x1xf32>
    %30 = vector.broadcast %29 : vector<1x8x1xf32> to vector<1x8x8xf32>
    %31 = arith.subf %27, %30 : vector<1x8x8xf32>
    %32 = math.exp %31 : vector<1x8x8xf32>
    %cst_14 = arith.constant dense<0.000000e+00> : vector<1x8xf32>
    %33 = vector.multi_reduction <add>, %32, %cst_14 [2] : vector<1x8x8xf32> to vector<1x8xf32>
    %34 = vector.shape_cast %33 : vector<1x8xf32> to vector<1x8x1xf32>
    %35 = arith.truncf %32 : vector<1x8x8xf32> to vector<1x8x8xbf16>
    "tpu.trace_start"() <{level = 10 : i32, message = "bqk,bkd->bqd"}> : () -> ()
    %cst_15 = arith.constant dense<0.000000e+00> : vector<1x8x128xf32>
    %36 = tpu.matmul %35, %26, %cst_15 {dimension_numbers = #tpu.dot_dimension_numbers<[2], [1], [1], [2], [0, 0, 0, 1, 1, 2], [0], [0]>} : vector<1x8x8xbf16>, vector<1x8x128xbf16>, vector<1x8x128xf32> -> vector<1x8x128xf32>
    "tpu.trace_stop"() : () -> ()
    %37 = tpu.reciprocal %34 {approx = true} : vector<1x8x1xf32> -> vector<1x8x1xf32>
    %38 = vector.broadcast %37 : vector<1x8x1xf32> to vector<1x8x128xf32>
    %39 = arith.mulf %36, %38 : vector<1x8x128xf32>
    %40 = arith.truncf %39 : vector<1x8x128xf32> to vector<1x8x128xbf16>
    %c0_16 = arith.constant 0 : index
    %c0_17 = arith.constant 0 : index
    %c0_18 = arith.constant 0 : index
    %41 = vector.load %arg10[%c0_16, %c0_17, %c0_18] : memref<1x8x256xbf16, #tpu.memory_space<vmem>>, vector<1x8x128xbf16>
    tpu.vector_store %arg10[%c0_16, %c0_17, %c0_18], %40 {strides = array<i32>} : memref<1x8x256xbf16, #tpu.memory_space<vmem>>, vector<1x8x128xbf16>,
    %42 = vector.extract_strided_slice %20 {offsets = [0, 0, 128], sizes = [1, 8, 128], strides = [1, 1, 1]} : vector<1x8x768xf32> to vector<1x8x128xf32>
    %43 = arith.truncf %42 : vector<1x8x128xf32> to vector<1x8x128xbf16>
    %44 = vector.extract_strided_slice %20 {offsets = [0, 0, 384], sizes = [1, 8, 128], strides = [1, 1, 1]} : vector<1x8x768xf32> to vector<1x8x128xf32>
    %45 = arith.truncf %44 : vector<1x8x128xf32> to vector<1x8x128xbf16>
    %46 = vector.extract_strided_slice %20 {offsets = [0, 0, 640], sizes = [1, 8, 128], strides = [1, 1, 1]} : vector<1x8x768xf32> to vector<1x8x128xf32>
    %47 = arith.truncf %46 : vector<1x8x128xf32> to vector<1x8x128xbf16>
    "tpu.trace_start"() <{level = 10 : i32, message = "bqd,bkd->bqk"}> : () -> ()
    %cst_19 = arith.constant dense<0.000000e+00> : vector<1x8x8xf32>
    %48 = tpu.matmul %43, %45, %cst_19 {dimension_numbers = #tpu.dot_dimension_numbers<[2], [2], [1], [1], [0, 0, 0, 1, 1, 1], [0], [0]>} : vector<1x8x128xbf16>, vector<1x8x128xbf16>, vector<1x8x8xf32> -> vector<1x8x8xf32>
    "tpu.trace_stop"() : () -> ()
    %cst_20 = arith.constant dense<0xFF800000> : vector<1x8xf32>
    %49 = vector.multi_reduction <maximumf>, %48, %cst_20 [2] : vector<1x8x8xf32> to vector<1x8xf32>
    %50 = vector.shape_cast %49 : vector<1x8xf32> to vector<1x8x1xf32>
    %51 = vector.broadcast %50 : vector<1x8x1xf32> to vector<1x8x8xf32>
    %52 = arith.subf %48, %51 : vector<1x8x8xf32>
    %53 = math.exp %52 : vector<1x8x8xf32>
    %cst_21 = arith.constant dense<0.000000e+00> : vector<1x8xf32>
    %54 = vector.multi_reduction <add>, %53, %cst_21 [2] : vector<1x8x8xf32> to vector<1x8xf32>
    %55 = vector.shape_cast %54 : vector<1x8xf32> to vector<1x8x1xf32>
    %56 = arith.truncf %53 : vector<1x8x8xf32> to vector<1x8x8xbf16>
    "tpu.trace_start"() <{level = 10 : i32, message = "bqk,bkd->bqd"}> : () -> ()
    %cst_22 = arith.constant dense<0.000000e+00> : vector<1x8x128xf32>
    %57 = tpu.matmul %56, %47, %cst_22 {dimension_numbers = #tpu.dot_dimension_numbers<[2], [1], [1], [2], [0, 0, 0, 1, 1, 2], [0], [0]>} : vector<1x8x8xbf16>, vector<1x8x128xbf16>, vector<1x8x128xf32> -> vector<1x8x128xf32>
    "tpu.trace_stop"() : () -> ()
    %58 = tpu.reciprocal %55 {approx = true} : vector<1x8x1xf32> -> vector<1x8x1xf32>
    %59 = vector.broadcast %58 : vector<1x8x1xf32> to vector<1x8x128xf32>
    %60 = arith.mulf %57, %59 : vector<1x8x128xf32>
    %61 = arith.truncf %60 : vector<1x8x128xf32> to vector<1x8x128xbf16>
    %c0_23 = arith.constant 0 : index
    %c0_24 = arith.constant 0 : index
    %c128 = arith.constant 128 : index
    %62 = vector.load %arg10[%c0_23, %c0_24, %c128] : memref<1x8x256xbf16, #tpu.memory_space<vmem>>, vector<1x8x128xbf16>
    tpu.vector_store %arg10[%c0_23, %c0_24, %c128], %61 {strides = array<i32>} : memref<1x8x256xbf16, #tpu.memory_space<vmem>>, vector<1x8x128xbf16>,
    %c0_25 = arith.constant 0 : index
    %c0_26 = arith.constant 0 : index
    %c0_27 = arith.constant 0 : index
    %63 = vector.load %arg10[%c0_25, %c0_26, %c0_27] : memref<1x8x256xbf16, #tpu.memory_space<vmem>>, vector<1x8x256xbf16>
    %64 = vector.shape_cast %63 : vector<1x8x256xbf16> to vector<8x256xbf16>
    %c0_28 = arith.constant 0 : index
    %c0_29 = arith.constant 0 : index
    %65 = vector.load %arg4[%c0_28, %c0_29] : memref<256x256xbf16, #tpu.memory_space<vmem>>, vector<256x256xbf16>
    %cst_30 = arith.constant dense<0.000000e+00> : vector<8x256xf32>
    %66 = tpu.matmul %64, %65, %cst_30 {dimension_numbers = #tpu.dot_dimension_numbers<[1], [0], [0], [1], [0, 0, 1, 1], [], []>} : vector<8x256xbf16>, vector<256x256xbf16>, vector<8x256xf32> -> vector<8x256xf32>
    %67 = arith.addf %3, %66 : vector<8x256xf32>
    %c0_31 = arith.constant 0 : index
    %c0_32 = arith.constant 0 : index
    %68 = vector.load %arg6[%c0_31, %c0_32] : memref<1x256xf32, #tpu.memory_space<vmem>>, vector<1x256xf32>
    %69 = arith.mulf %67, %67 : vector<8x256xf32>
    %cst_33 = arith.constant dense<0.000000e+00> : vector<8xf32>
    %70 = vector.multi_reduction <add>, %69, %cst_33 [1] : vector<8x256xf32> to vector<8xf32>
    %71 = vector.shape_cast %70 : vector<8xf32> to vector<8x1xf32>
    %cst_34 = arith.constant 2.560000e+02 : f32
    %72 = vector.broadcast %cst_34 : f32 to vector<8x1xf32>
    %73 = arith.divf %71, %72 : vector<8x1xf32>
    %cst_35 = arith.constant 9.99999997E-7 : f32
    %74 = vector.broadcast %cst_35 : f32 to vector<8x1xf32>
    %75 = arith.addf %73, %74 : vector<8x1xf32>
    %76 = math.rsqrt %75 : vector<8x1xf32>
    %77 = vector.broadcast %76 : vector<8x1xf32> to vector<8x256xf32>
    %78 = arith.mulf %67, %77 : vector<8x256xf32>
    %79 = vector.broadcast %68 : vector<1x256xf32> to vector<8x256xf32>
    %80 = arith.mulf %78, %79 : vector<8x256xf32>
    %81 = arith.truncf %80 : vector<8x256xf32> to vector<8x256xbf16>
    %c0_36 = arith.constant 0 : index
    %c0_37 = arith.constant 0 : index
    %82 = vector.load %arg7[%c0_36, %c0_37] : memref<256x512xbf16, #tpu.memory_space<vmem>>, vector<256x512xbf16>
    %cst_38 = arith.constant dense<0.000000e+00> : vector<8x512xf32>
    %83 = tpu.matmul %81, %82, %cst_38 {dimension_numbers = #tpu.dot_dimension_numbers<[1], [0], [0], [1], [0, 0, 1, 1], [], []>} : vector<8x256xbf16>, vector<256x512xbf16>, vector<8x512xf32> -> vector<8x512xf32>
    %84 = vector.extract_strided_slice %83 {offsets = [0, 0], sizes = [8, 256], strides = [1, 1]} : vector<8x512xf32> to vector<8x256xf32>
    %85 = vector.extract_strided_slice %83 {offsets = [0, 256], sizes = [8, 256], strides = [1, 1]} : vector<8x512xf32> to vector<8x256xf32>
    %86 = arith.negf %84 : vector<8x256xf32>
    %87 = math.exp %86 : vector<8x256xf32>
    %cst_39 = arith.constant 1.000000e+00 : f32
    %88 = vector.broadcast %cst_39 : f32 to vector<8x256xf32>
    %89 = arith.addf %88, %87 : vector<8x256xf32>
    %90 = arith.divf %88, %89 : vector<8x256xf32>
    %91 = arith.mulf %84, %90 : vector<8x256xf32>
    %92 = arith.mulf %91, %85 : vector<8x256xf32>
    %93 = arith.truncf %92 : vector<8x256xf32> to vector<8x256xbf16>
    %c0_40 = arith.constant 0 : index
    %c0_41 = arith.constant 0 : index
    %94 = vector.load %arg8[%c0_40, %c0_41] : memref<256x256xbf16, #tpu.memory_space<vmem>>, vector<256x256xbf16>
    %cst_42 = arith.constant dense<0.000000e+00> : vector<8x256xf32>
    %95 = tpu.matmul %93, %94, %cst_42 {dimension_numbers = #tpu.dot_dimension_numbers<[1], [0], [0], [1], [0, 0, 1, 1], [], []>} : vector<8x256xbf16>, vector<256x256xbf16>, vector<8x256xf32> -> vector<8x256xf32>
    %96 = arith.addf %67, %95 : vector<8x256xf32>
    %97 = vector.shape_cast %96 : vector<8x256xf32> to vector<1x8x256xf32>
    %c0_43 = arith.constant 0 : index
    %c0_44 = arith.constant 0 : index
    %c0_45 = arith.constant 0 : index
    %98 = vector.load %arg9[%c0_43, %c0_44, %c0_45] : memref<1x8x256xf32, #tpu.memory_space<vmem>>, vector<1x8x256xf32>
    tpu.vector_store %arg9[%c0_43, %c0_44, %c0_45], %97 {strides = array<i32>} : memref<1x8x256xf32, #tpu.memory_space<vmem>>, vector<1x8x256xf32>,
    return
  }
  func.func @transform_0(%arg0: i32) -> (i32, i32, i32) {
    %c0_i32 = arith.constant 0 : i32
    %c0_i32_0 = arith.constant 0 : i32
    %c0_i32_1 = arith.constant 0 : i32
    return %arg0, %c0_i32, %c0_i32_0 : i32, i32, i32
  }
  func.func @transform_1(%arg0: i32) -> (i32, i32, i32) {
    %c0_i32 = arith.constant 0 : i32
    %c0_i32_0 = arith.constant 0 : i32
    %c0_i32_1 = arith.constant 0 : i32
    return %arg0, %c0_i32, %c0_i32_0 : i32, i32, i32
  }
  func.func @transform_2(%arg0: i32) -> (i32, i32) {
    %c0_i32 = arith.constant 0 : i32
    %c0_i32_0 = arith.constant 0 : i32
    %c0_i32_1 = arith.constant 0 : i32
    return %c0_i32, %c0_i32_0 : i32, i32
  }
  func.func @transform_3(%arg0: i32) -> (i32, i32) {
    %c0_i32 = arith.constant 0 : i32
    %c0_i32_0 = arith.constant 0 : i32
    %c0_i32_1 = arith.constant 0 : i32
    return %c0_i32, %c0_i32_0 : i32, i32
  }
  func.func @transform_4(%arg0: i32) -> (i32, i32) {
    %c0_i32 = arith.constant 0 : i32
    %c0_i32_0 = arith.constant 0 : i32
    %c0_i32_1 = arith.constant 0 : i32
    return %c0_i32, %c0_i32_0 : i32, i32
  }
  func.func @transform_5(%arg0: i32) -> (i32, i32) {
    %c0_i32 = arith.constant 0 : i32
    %c0_i32_0 = arith.constant 0 : i32
    %c0_i32_1 = arith.constant 0 : i32
    return %c0_i32, %c0_i32_0 : i32, i32
  }
  func.func @transform_6(%arg0: i32) -> (i32, i32) {
    %c0_i32 = arith.constant 0 : i32
    %c0_i32_0 = arith.constant 0 : i32
    %c0_i32_1 = arith.constant 0 : i32
    return %c0_i32, %c0_i32_0 : i32, i32
  }
  func.func @transform_7(%arg0: i32) -> (i32, i32) {
    %c0_i32 = arith.constant 0 : i32
    %c0_i32_0 = arith.constant 0 : i32
    %c0_i32_1 = arith.constant 0 : i32
    return %c0_i32, %c0_i32_0 : i32, i32
  }
  func.func @transform_8(%arg0: i32) -> (i32, i32, i32) {
    %c0_i32 = arith.constant 0 : i32
    %c0_i32_0 = arith.constant 0 : i32
    %c0_i32_1 = arith.constant 0 : i32
    return %arg0, %c0_i32, %c0_i32_0 : i32, i32, i32
  }
}

</mosaic_0001>

<llo_original>
// kernel: tpu_custom_call.1
$region0: #{tpu_custom_call.1}
  #allocation0 [shape = 'u32[]', space=smem, size = 0x4, offset = 0x4, fixed_abs, tag = 'smem constant byte address 0x4 - core index']
  #allocation1 [shape = 'u32[72,128]{1,0:T(1,128)}', space=vmem, size = 0x9000, scoped, tag = 'internal scratch']
  #allocation2 [shape = 'bf16[1,8,256]{2,1,0:T(8,128)(2,1)}', space=vmem, size = 0x1000, scoped, tag = 'scratch operand']
  %s0 = inlined_call_operand.hbm [shape: f32[2,8,256], index: 0, kind: input, shape index: {}]
  %s1 = inlined_call_operand.hbm [shape: f32[2,8,256], index: 1, kind: input, shape index: {}]
  %s2 = inlined_call_operand.hbm [shape: bf16[256,768], index: 2, kind: input, shape index: {}]
  %s3 = inlined_call_operand.hbm [shape: bf16[256,256], index: 3, kind: input, shape index: {}]
  %s4 = inlined_call_operand.vmem [shape: f32[1,256], index: 4, kind: input, shape index: {}]
  %s5 = inlined_call_operand.vmem [shape: f32[1,256], index: 5, kind: input, shape index: {}]
  %s6 = inlined_call_operand.hbm [shape: bf16[256,512], index: 6, kind: input, shape index: {}]
  %s7 = inlined_call_operand.hbm [shape: bf16[256,256], index: 7, kind: input, shape index: {}]
  %s8 = inlined_call_operand.hbm [shape: f32[2,8,256], index: 8, kind: output, shape index: {}]
  %s9 = sld [smem:[#allocation0]]
  $region89: #{tpu_custom_call.1} parent=0
    _
  %s11 = ssub.s32 1, %s9
  %s12 = scalar_select 0, %s11, %s9
  $region1: #{tpu_custom_call.1} parent=0
    #allocation3 [shape = 'u8[16384]{0}', space=vmem, size = 0x4000, scoped, tag = 'input window, operand 0']
    #allocation4 [shape = 's32[2]{0}', space=sflag, size = 0x8, scoped, tag = 'scoped memory for tpu_custom_call.1']
    #allocation5 [shape = 's32[2]{0}', space=sflag, size = 0x8, scoped, tag = 'scoped memory for tpu_custom_call.1']
    #allocation6 [shape = 'u8[16384]{0}', space=vmem, size = 0x4000, scoped, tag = 'input window, operand 1']
    #allocation7 [shape = 's32[2]{0}', space=sflag, size = 0x8, scoped, tag = 'scoped memory for tpu_custom_call.1']
    #allocation8 [shape = 'u8[393216]{0}', space=vmem, size = 0x60000, scoped, tag = 'input window, operand 2, single buffered']
    #allocation9 [shape = 'u8[131072]{0}', space=vmem, size = 0x20000, scoped, tag = 'input window, operand 3, single buffered']
    #allocation10 [shape = 's32[1]{0}', space=sflag, size = 0x4, scoped, tag = 'scoped memory for tpu_custom_call.1']
    #allocation11 [shape = 'u8[262144]{0}', space=vmem, size = 0x40000, scoped, tag = 'input window, operand 6, single buffered']
    #allocation12 [shape = 'u8[131072]{0}', space=vmem, size = 0x20000, scoped, tag = 'input window, operand 7, single buffered']
    #allocation13 [shape = 's32[1]{0}', space=sflag, size = 0x4, scoped, tag = 'scoped memory for tpu_custom_call.1']
    #allocation14 [shape = 'u8[16384]{0}', space=vmem, size = 0x4000, scoped, tag = 'output window, operand 0']
    %13 = vsyncpa [#allocation4], 0
    %s14 = scalar_lea.sflag [#allocation4], 1
    %15 = vsyncpa %s14, 0
    %16 = vsyncpa [#allocation7], 0
    %s17 = scalar_lea.sflag [#allocation7], 1
    %18 = vsyncpa %s17, 0
    %19 = vsyncpa [#allocation10], 0
    %20 = vsyncpa [#allocation13], 0
    %21 = vsyncpa [#allocation5], 0
    %s22 = scalar_lea.sflag [#allocation5], 1
    %23 = vsyncpa %s22, 0
    loop: start=0, step=1, limit=4
    $region2: #{tpu_custom_call.1} parent=1 // loop_pre_header
      _
    $region3: #{tpu_custom_call.1} parent=1 // loop_header
      %s25 = sphi 0, %s29
      %p26 = scmp.ge.s32.totalorder %s25, 4
      %s35 = sphi 0, %s37
      %s38 = sphi 0, %s35
      %s39 = sphi 0, %s38
      %s55 = sphi 0, %s39
      %s61 = sphi 0, %s63
      %s64 = sphi 0, %s61
      %s65 = sphi 0, %s64
      %s81 = sphi 0, %s65
      %s85 = sphi 0, %s85
      %s87 = sphi 0, %s85
      %s88 = sphi 0, %s87
      %s102 = sphi 0, %s88
      %s106 = sphi 0, %s106
      %s108 = sphi 0, %s106
      %s109 = sphi 0, %s108
      %s123 = sphi 0, %s109
      %s127 = sphi 0, %s127
      %s129 = sphi 0, %s127
      %s130 = sphi 0, %s129
      %s144 = sphi 0, %s130
      %s148 = sphi 0, %s148
      %s150 = sphi 0, %s148
      %s151 = sphi 0, %s150
      %s165 = sphi 0, %s151
      %s169 = sphi 0, %s169
      %s171 = sphi 0, %s169
      %s172 = sphi 0, %s171
      %s186 = sphi 0, %s172
      %s190 = sphi 0, %s190
      %s192 = sphi 0, %s190
      %s193 = sphi 0, %s192
      %s207 = sphi 0, %s193
      %s213 = sphi 0, %s215
      %s216 = sphi 0, %s213
      %s217 = sphi 0, %s216
      %s233 = sphi 0, %s217
    $region4: #{tpu_custom_call.1} parent=1 // loop_header_branch
      %28 = sbr.rel (%p26) target = $region8
    $region5: #{tpu_custom_call.1} parent=1 // loop_body
      %s30 = ssub.s32 %s25, 1
      %s31 = ssub.s32 %s25, 2
      %s32 = sadd.s32 %s25, 1
      %s33 = ssub.s32 %s25, %s32
      %p34 = scmp.eq.s32.totalorder %s33, 0
      %s36 = sadd.s32 %s35, 1
      %s37 = scalar_select %p34, %s35, %s36
      %p40 = pneg %p34
      %p41 = scmp.eq.s32.totalorder %s25, 1
      %p42 = por %p40, %p41
      %p43 = scmp.ne.s32.totalorder %s35, %s38
      %p44 = scmp.eq.s32.totalorder %s25, 0
      %p45 = por %p43, %p44
      %p46 = scmp.ne.s32.totalorder %s35, %s38
      %p47 = scmp.eq.s32.totalorder %s30, 1
      %p48 = por %p46, %p47
      %p49 = scmp.ne.s32.totalorder %s38, %s39
      %p50 = scmp.eq.s32.totalorder %s30, 0
      %p51 = por %p49, %p50
      %p52 = scmp.ne.s32.totalorder %s38, %s39
      %p53 = scmp.eq.s32.totalorder %s31, 1
      %p54 = por %p52, %p53
      %p56 = scmp.ne.s32.totalorder %s39, %s55
      %p57 = scmp.eq.s32.totalorder %s31, 0
      %p58 = por %p56, %p57
      %s59 = ssub.s32 %s25, %s32
      %p60 = scmp.eq.s32.totalorder %s59, 0
      %s62 = sadd.s32 %s61, 1
      %s63 = scalar_select %p60, %s61, %s62
      %p66 = pneg %p60
      %p67 = scmp.eq.s32.totalorder %s25, 1
      %p68 = por %p66, %p67
      %p69 = scmp.ne.s32.totalorder %s61, %s64
      %p70 = scmp.eq.s32.totalorder %s25, 0
      %p71 = por %p69, %p70
      %p72 = scmp.ne.s32.totalorder %s61, %s64
      %p73 = scmp.eq.s32.totalorder %s30, 1
      %p74 = por %p72, %p73
      %p75 = scmp.ne.s32.totalorder %s64, %s65
      %p76 = scmp.eq.s32.totalorder %s30, 0
      %p77 = por %p75, %p76
      %p78 = scmp.ne.s32.totalorder %s64, %s65
      %p79 = scmp.eq.s32.totalorder %s31, 1
      %p80 = por %p78, %p79
      %p82 = scmp.ne.s32.totalorder %s65, %s81
      %p83 = scmp.eq.s32.totalorder %s31, 0
      %p84 = por %p82, %p83
      %s86 = sadd.s32 %s85, 1
      %p89 = scmp.eq.s32.totalorder %s25, 1
      %p90 = scmp.ne.s32.totalorder %s85, %s87
      %p91 = scmp.eq.s32.totalorder %s25, 0
      %p92 = por %p90, %p91
      %p93 = scmp.ne.s32.totalorder %s85, %s87
      %p94 = scmp.eq.s32.totalorder %s30, 1
      %p95 = por %p93, %p94
      %p96 = scmp.ne.s32.totalorder %s87, %s88
      %p97 = scmp.eq.s32.totalorder %s30, 0
      %p98 = por %p96, %p97
      %p99 = scmp.ne.s32.totalorder %s87, %s88
      %p100 = scmp.eq.s32.totalorder %s31, 1
      %p101 = por %p99, %p100
      %p103 = scmp.ne.s32.totalorder %s88, %s102
      %p104 = scmp.eq.s32.totalorder %s31, 0
      %p105 = por %p103, %p104
      %s107 = sadd.s32 %s106, 1
      %p110 = scmp.eq.s32.totalorder %s25, 1
      %p111 = scmp.ne.s32.totalorder %s106, %s108
      %p112 = scmp.eq.s32.totalorder %s25, 0
      %p113 = por %p111, %p112
      %p114 = scmp.ne.s32.totalorder %s106, %s108
      %p115 = scmp.eq.s32.totalorder %s30, 1
      %p116 = por %p114, %p115
      %p117 = scmp.ne.s32.totalorder %s108, %s109
      %p118 = scmp.eq.s32.totalorder %s30, 0
      %p119 = por %p117, %p118
      %p120 = scmp.ne.s32.totalorder %s108, %s109
      %p121 = scmp.eq.s32.totalorder %s31, 1
      %p122 = por %p120, %p121
      %p124 = scmp.ne.s32.totalorder %s109, %s123
      %p125 = scmp.eq.s32.totalorder %s31, 0
      %p126 = por %p124, %p125
      %s128 = sadd.s32 %s127, 1
      %p131 = scmp.eq.s32.totalorder %s25, 1
      %p132 = scmp.ne.s32.totalorder %s127, %s129
      %p133 = scmp.eq.s32.totalorder %s25, 0
      %p134 = por %p132, %p133
      %p135 = scmp.ne.s32.totalorder %s127, %s129
      %p136 = scmp.eq.s32.totalorder %s30, 1
      %p137 = por %p135, %p136
      %p138 = scmp.ne.s32.totalorder %s129, %s130
      %p139 = scmp.eq.s32.totalorder %s30, 0
      %p140 = por %p138, %p139
      %p141 = scmp.ne.s32.totalorder %s129, %s130
      %p142 = scmp.eq.s32.totalorder %s31, 1
      %p143 = por %p141, %p142
      %p145 = scmp.ne.s32.totalorder %s130, %s144
      %p146 = scmp.eq.s32.totalorder %s31, 0
      %p147 = por %p145, %p146
      %s149 = sadd.s32 %s148, 1
      %p152 = scmp.eq.s32.totalorder %s25, 1
      %p153 = scmp.ne.s32.totalorder %s148, %s150
      %p154 = scmp.eq.s32.totalorder %s25, 0
      %p155 = por %p153, %p154
      %p156 = scmp.ne.s32.totalorder %s148, %s150
      %p157 = scmp.eq.s32.totalorder %s30, 1
      %p158 = por %p156, %p157
      %p159 = scmp.ne.s32.totalorder %s150, %s151
      %p160 = scmp.eq.s32.totalorder %s30, 0
      %p161 = por %p159, %p160
      %p162 = scmp.ne.s32.totalorder %s150, %s151
      %p163 = scmp.eq.s32.totalorder %s31, 1
      %p164 = por %p162, %p163
      %p166 = scmp.ne.s32.totalorder %s151, %s165
      %p167 = scmp.eq.s32.totalorder %s31, 0
      %p168 = por %p166, %p167
      %s170 = sadd.s32 %s169, 1
      %p173 = scmp.eq.s32.totalorder %s25, 1
      %p174 = scmp.ne.s32.totalorder %s169, %s171
      %p175 = scmp.eq.s32.totalorder %s25, 0
      %p176 = por %p174, %p175
      %p177 = scmp.ne.s32.totalorder %s169, %s171
      %p178 = scmp.eq.s32.totalorder %s30, 1
      %p179 = por %p177, %p178
      %p180 = scmp.ne.s32.totalorder %s171, %s172
      %p181 = scmp.eq.s32.totalorder %s30, 0
      %p182 = por %p180, %p181
      %p183 = scmp.ne.s32.totalorder %s171, %s172
      %p184 = scmp.eq.s32.totalorder %s31, 1
      %p185 = por %p183, %p184
      %p187 = scmp.ne.s32.totalorder %s172, %s186
      %p188 = scmp.eq.s32.totalorder %s31, 0
      %p189 = por %p187, %p188
      %s191 = sadd.s32 %s190, 1
      %p194 = scmp.eq.s32.totalorder %s25, 1
      %p195 = scmp.ne.s32.totalorder %s190, %s192
      %p196 = scmp.eq.s32.totalorder %s25, 0
      %p197 = por %p195, %p196
      %p198 = scmp.ne.s32.totalorder %s190, %s192
      %p199 = scmp.eq.s32.totalorder %s30, 1
      %p200 = por %p198, %p199
      %p201 = scmp.ne.s32.totalorder %s192, %s193
      %p202 = scmp.eq.s32.totalorder %s30, 0
      %p203 = por %p201, %p202
      %p204 = scmp.ne.s32.totalorder %s192, %s193
      %p205 = scmp.eq.s32.totalorder %s31, 1
      %p206 = por %p204, %p205
      %p208 = scmp.ne.s32.totalorder %s193, %s207
      %p209 = scmp.eq.s32.totalorder %s31, 0
      %p210 = por %p208, %p209
      %s211 = ssub.s32 %s25, %s32
      %p212 = scmp.eq.s32.totalorder %s211, 0
      %s214 = sadd.s32 %s213, 1
      %s215 = scalar_select %p212, %s213, %s214
      %p218 = pneg %p212
      %p219 = scmp.eq.s32.totalorder %s25, 1
      %p220 = por %p218, %p219
      %p221 = scmp.ne.s32.totalorder %s213, %s216
      %p222 = scmp.eq.s32.totalorder %s25, 0
      %p223 = por %p221, %p222
      %p224 = scmp.ne.s32.totalorder %s213, %s216
      %p225 = scmp.eq.s32.totalorder %s30, 1
      %p226 = por %p224, %p225
      %p227 = scmp.ne.s32.totalorder %s216, %s217
      %p228 = scmp.eq.s32.totalorder %s30, 0
      %p229 = por %p227, %p228
      %p230 = scmp.ne.s32.totalorder %s216, %s217
      %p231 = scmp.eq.s32.totalorder %s31, 1
      %p232 = por %p230, %p231
      %p234 = scmp.ne.s32.totalorder %s217, %s233
      %p235 = scmp.eq.s32.totalorder %s31, 0
      %p236 = por %p234, %p235
      %p237 = scmp.le.s32.totalorder 1, %s25
      %p238 = scmp.lt.s32.totalorder %s25, 3
      %p239 = pnand %p237, %p238
      %p240 = pneg %p239
      // Predicated region
      $region9: #{tpu_custom_call.1} parent=5 // pred_check
        _
      $region10: #{tpu_custom_call.1} parent=5 // pred_check_branch
        %242 = sbr.rel (%p239) target = $region12
      $region11: #{tpu_custom_call.1} parent=5 // pred_region
        %s243 = ssub.s32 %s25, 1
        // Predicated region
        $region13: #{tpu_custom_call.1} parent=11 // pred_check
          %p244 = pneg %p98
        $region14: #{tpu_custom_call.1} parent=11 // pred_check_branch
          %246 = sbr.rel (%p244) target = $region16
        $region15: #{tpu_custom_call.1} parent=11 // pred_region
          %248 = vsyncadd [#allocation7], 0
          %s249 = sshll.u32 %s2, 4
          %s250 = int_to_ptr.hbm [resolvable:$true] %s249
          %s251 = sshll.u32 [#allocation8], 4
          %s252 = int_to_ptr.vmem [resolvable:$true] %s251
          %257 = dma.hbm_to_vmem [thread:$0]  %s250, 12288, %s252, [#allocation7], 384, 384, 24
        $region16: #{tpu_custom_call.1} parent=11 // pred_fallthru
          _
        // Predicated region
        $region17: #{tpu_custom_call.1} parent=11 // pred_check
          %p258 = pneg %p119
        $region18: #{tpu_custom_call.1} parent=11 // pred_check_branch
          %260 = sbr.rel (%p258) target = $region20
        $region19: #{tpu_custom_call.1} parent=11 // pred_region
          %262 = vsyncadd [#allocation10], 0
          %s263 = sshll.u32 %s3, 4
          %s264 = int_to_ptr.hbm [resolvable:$true] %s263
          %s265 = sshll.u32 [#allocation9], 4
          %s266 = int_to_ptr.vmem [resolvable:$true] %s265
          %271 = dma.hbm_to_vmem [thread:$0]  %s264, 4096, %s266, [#allocation10], 128, 128, 8
        $region20: #{tpu_custom_call.1} parent=11 // pred_fallthru
          _
        // Predicated region
        $region21: #{tpu_custom_call.1} parent=11 // pred_check
          %p272 = pneg %p140
        $region22: #{tpu_custom_call.1} parent=11 // pred_check_branch
          %274 = sbr.rel (%p272) target = $region24
        $region23: #{tpu_custom_call.1} parent=11 // pred_region
          _
        $region24: #{tpu_custom_call.1} parent=11 // pred_fallthru
          _
        // Predicated region
        $region25: #{tpu_custom_call.1} parent=11 // pred_check
          %p275 = pneg %p161
        $region26: #{tpu_custom_call.1} parent=11 // pred_check_branch
          %277 = sbr.rel (%p275) target = $region28
        $region27: #{tpu_custom_call.1} parent=11 // pred_region
          _
        $region28: #{tpu_custom_call.1} parent=11 // pred_fallthru
          _
        // Predicated region
        $region29: #{tpu_custom_call.1} parent=11 // pred_check
          %p278 = pneg %p182
        $region30: #{tpu_custom_call.1} parent=11 // pred_check_branch
          %280 = sbr.rel (%p278) target = $region32
        $region31: #{tpu_custom_call.1} parent=11 // pred_region
          %282 = vsyncadd [#allocation10], 0
          %s283 = sshll.u32 %s6, 4
          %s284 = int_to_ptr.hbm [resolvable:$true] %s283
          %s285 = sshll.u32 [#allocation11], 4
          %s286 = int_to_ptr.vmem [resolvable:$true] %s285
          %291 = dma.hbm_to_vmem [thread:$0]  %s284, 8192, %s286, [#allocation10], 256, 256, 16
        $region32: #{tpu_custom_call.1} parent=11 // pred_fallthru
          _
        // Predicated region
        $region33: #{tpu_custom_call.1} parent=11 // pred_check
          %p292 = pneg %p203
        $region34: #{tpu_custom_call.1} parent=11 // pred_check_branch
          %294 = sbr.rel (%p292) target = $region36
        $region35: #{tpu_custom_call.1} parent=11 // pred_region
          %296 = vsyncadd [#allocation13], 0
          %s297 = sshll.u32 %s7, 4
          %s298 = int_to_ptr.hbm [resolvable:$true] %s297
          %s299 = sshll.u32 [#allocation12], 4
          %s300 = int_to_ptr.vmem [resolvable:$true] %s299
          %305 = dma.hbm_to_vmem [thread:$0]  %s298, 4096, %s300, [#allocation13], 128, 128, 8
        $region36: #{tpu_custom_call.1} parent=11 // pred_fallthru
          _
      $region12: #{tpu_custom_call.1} parent=5 // pred_fallthru
        _
      %p306 = scmp.lt.s32.totalorder %s25, 2
      // Predicated region
      $region37: #{tpu_custom_call.1} parent=5 // pred_check
        %p307 = pneg %p306
      $region38: #{tpu_custom_call.1} parent=5 // pred_check_branch
        %309 = sbr.rel (%p307) target = $region40
      $region39: #{tpu_custom_call.1} parent=5 // pred_region
        // Predicated region
        $region41: #{tpu_custom_call.1} parent=39 // pred_check
          %p310 = pneg %p45
        $region42: #{tpu_custom_call.1} parent=39 // pred_check_branch
          %312 = sbr.rel (%p310) target = $region44
        $region43: #{tpu_custom_call.1} parent=39 // pred_region
          %s313 = sand.u32 %s35, 1
          %s314 = scalar_lea.sflag [#allocation4], %s313
          %s315 = sand.u32 %s35, 1
          %s316 = smul.addr %s315, 16
          %s317 = scalar_lea.vmem [#allocation3], %s316
          %319 = vsyncadd %s314, 0
          %s320 = smul.addr %s25, 2
          %s321 = smul.addr %s320, 8
          %s322 = scalar_lea.hbm %s0, %s321
          %s324 = sshll.u32 %s322, 4
          %s325 = int_to_ptr.hbm [resolvable:$true] %s324
          %s326 = sshll.u32 %s317, 4
          %s327 = int_to_ptr.vmem [resolvable:$true] %s326
          %329 = dma.hbm_to_vmem [thread:$0]  %s325, 256, %s327, %s314
        $region44: #{tpu_custom_call.1} parent=39 // pred_fallthru
          _
        // Predicated region
        $region45: #{tpu_custom_call.1} parent=39 // pred_check
          %p330 = pneg %p71
        $region46: #{tpu_custom_call.1} parent=39 // pred_check_branch
          %332 = sbr.rel (%p330) target = $region48
        $region47: #{tpu_custom_call.1} parent=39 // pred_region
          %s333 = sand.u32 %s25, 1
          %s334 = scalar_lea.sflag [#allocation7], %s333
          %s335 = sand.u32 %s61, 1
          %s336 = smul.addr %s335, 16
          %s337 = scalar_lea.vmem [#allocation6], %s336
          %339 = vsyncadd %s334, 0
          %s340 = smul.addr %s25, 2
          %s341 = smul.addr %s340, 8
          %s342 = scalar_lea.hbm %s1, %s341
          %s344 = sshll.u32 %s342, 4
          %s345 = int_to_ptr.hbm [resolvable:$true] %s344
          %s346 = sshll.u32 %s337, 4
          %s347 = int_to_ptr.vmem [resolvable:$true] %s346
          %349 = dma.hbm_to_vmem [thread:$0]  %s345, 256, %s347, %s334
        $region48: #{tpu_custom_call.1} parent=39 // pred_fallthru
          _
      $region40: #{tpu_custom_call.1} parent=5 // pred_fallthru
        _
      %p350 = scmp.le.s32.totalorder 1, %s25
      %p351 = scmp.lt.s32.totalorder %s25, 3
      %p352 = pnand %p350, %p351
      %p353 = pneg %p352
      // Predicated region
      $region49: #{tpu_custom_call.1} parent=5 // pred_check
        _
      $region50: #{tpu_custom_call.1} parent=5 // pred_check_branch
        %355 = sbr.rel (%p352) target = $region52
      $region51: #{tpu_custom_call.1} parent=5 // pred_region
        %s356 = ssub.s32 %s25, 1
        %s357 = sand.u32 %s38, 1
        %s358 = scalar_lea.sflag [#allocation4], %s357
        %s359 = sand.u32 %s38, 1
        %s360 = smul.addr %s359, 16
        %s361 = scalar_lea.vmem [#allocation3], %s360
        // Predicated region
        $region53: #{tpu_custom_call.1} parent=51 // pred_check
          %p362 = pneg %p51
        $region54: #{tpu_custom_call.1} parent=51 // pred_check_branch
          %364 = sbr.rel (%p362) target = $region56
        $region55: #{tpu_custom_call.1} parent=51 // pred_region
          %366 = dma.done %s358, 256
        $region56: #{tpu_custom_call.1} parent=51 // pred_fallthru
          _
        %s367 = sand.u32 %s30, 1
        %s368 = scalar_lea.sflag [#allocation7], %s367
        %s369 = sand.u32 %s64, 1
        %s370 = smul.addr %s369, 16
        %s371 = scalar_lea.vmem [#allocation6], %s370
        // Predicated region
        $region57: #{tpu_custom_call.1} parent=51 // pred_check
          %p372 = pneg %p77
        $region58: #{tpu_custom_call.1} parent=51 // pred_check_branch
          %374 = sbr.rel (%p372) target = $region60
        $region59: #{tpu_custom_call.1} parent=51 // pred_region
          %376 = dma.done %s368, 256
        $region60: #{tpu_custom_call.1} parent=51 // pred_fallthru
          _
        // Predicated region
        $region61: #{tpu_custom_call.1} parent=51 // pred_check
          %p377 = pneg %p98
        $region62: #{tpu_custom_call.1} parent=51 // pred_check_branch
          %379 = sbr.rel (%p377) target = $region64
        $region63: #{tpu_custom_call.1} parent=51 // pred_region
          %381 = dma.done [#allocation7], 12288
        $region64: #{tpu_custom_call.1} parent=51 // pred_fallthru
          _
        // Predicated region
        $region65: #{tpu_custom_call.1} parent=51 // pred_check
          %p382 = pneg %p119
        $region66: #{tpu_custom_call.1} parent=51 // pred_check_branch
          %384 = sbr.rel (%p382) target = $region68
        $region67: #{tpu_custom_call.1} parent=51 // pred_region
          %386 = dma.done [#allocation10], 4096
        $region68: #{tpu_custom_call.1} parent=51 // pred_fallthru
          _
        // Predicated region
        $region69: #{tpu_custom_call.1} parent=51 // pred_check
          %p387 = pneg %p182
        $region70: #{tpu_custom_call.1} parent=51 // pred_check_branch
          %389 = sbr.rel (%p387) target = $region72
        $region71: #{tpu_custom_call.1} parent=51 // pred_region
          %391 = dma.done [#allocation10], 8192
        $region72: #{tpu_custom_call.1} parent=51 // pred_fallthru
          _
        // Predicated region
        $region73: #{tpu_custom_call.1} parent=51 // pred_check
          %p392 = pneg %p203
        $region74: #{tpu_custom_call.1} parent=51 // pred_check_branch
          %394 = sbr.rel (%p392) target = $region76
        $region75: #{tpu_custom_call.1} parent=51 // pred_region
          %396 = dma.done [#allocation13], 4096
        $region76: #{tpu_custom_call.1} parent=51 // pred_fallthru
          _
        %s397 = sand.u32 %s38, 1
        %s398 = scalar_lea.sflag [#allocation4], %s397
        %s399 = sand.u32 %s38, 1
        %s400 = smul.addr %s399, 16
        %s401 = scalar_lea.vmem [#allocation3], %s400
        %p402 = pneg %p51
        %p403 = pneg %p48
        %s404 = sand.u32 %s30, 1
        %s405 = scalar_lea.sflag [#allocation7], %s404
        %s406 = sand.u32 %s64, 1
        %s407 = smul.addr %s406, 16
        %s408 = scalar_lea.vmem [#allocation6], %s407
        %p409 = pneg %p77
        %p410 = pneg %p74
        %p411 = pneg %p98
        %p412 = pneg %p95
        %p413 = pneg %p119
        %p414 = pneg %p116
        %p415 = pneg %p140
        %p416 = pneg %p137
        %p417 = pneg %p161
        %p418 = pneg %p158
        %p419 = pneg %p182
        %p420 = pneg %p179
        %p421 = pneg %p203
        %p422 = pneg %p200
        %p423 = pneg %p229
        %p424 = pneg %p226
        %s425 = sand.u32 %s216, 1
        %s426 = scalar_lea.sflag [#allocation5], %s425
        %s427 = sand.u32 %s216, 1
        %s428 = smul.addr %s427, 16
        %s429 = scalar_lea.vmem [#allocation14], %s428
        %v431 = vld [vmem:[%s361] sm:$0xff]
        %v432 = vld [vmem:[%s361 + $0x8] sm:$0xff]
        %v433 = vld [vmem:[%s371] sm:$0xff]
        %v434 = vld [vmem:[%s371 + $0x8] sm:$0xff]
        %v435 = vadd.f32 %v431, %v433
        %v436 = vadd.f32 %v432, %v434
        %v437 = vld [vmem:[%s4] sm:$0x3]
        %v438 = vmul.f32 %v435, %v435
        %v439 = vmul.f32 %v436, %v436
        %v440 = vadd.f32 %v438, %v439
        %441 = vadd.xlane.f32.xlu0 %v440
        %v442 = vpop.xlane.xlu0 %441
        %v443 = vrcp.pop 256.0
        %v444 = vmul.f32 256.0, %v443
        %v445 = vsub.f32 1.0, %v444
        %v446 = vmul.f32 %v443, %v445
        %v447 = vadd.f32 %v443, %v446
        %vm448 = vweird.f32 %v443
        %v449 = vsel %vm448, %v443, %v447
        %v450 = vmul.f32 %v442, %v449
        %v451 = vadd.f32 %v450, 1e-06
        %v452 = vrsqrt.pop %v451
        %v453 = vmul.f32 %v452, %v451
        %v454 = vmul.f32 %v453, %v452
        %v455 = vmul.f32 0.5, %v454
        %v456 = vsub.f32 1.5, %v455
        %v457 = vmul.f32 %v452, %v456
        %vm458 = vweird.f32 %v451
        %vm459 = vweird.f32 %v452
        %vm460 = vmor %vm458, %vm459
        %v461 = vsel %vm460, %v452, %v457
        %v462 = vmul.f32 %v435, %v461
        %v463 = vmul.f32 %v436, %v461
        %v465 = vperm.slane %v437, 0
        %v466 = vperm.slane %v437, 1
        %v469 = vmul.f32 %v462, %v465
        %v470 = vmul.f32 %v463, %v466
        %v471 = vpack.c.bf16 %v469, %v469
        %v472 = vpack.c.bf16 %v470, %v470
        %v473 = vld [vmem:[#allocation8] sm:$0xff]
        %v474 = vld [vmem:[#allocation8 + $0x8] sm:$0xff]
        %v475 = vld [vmem:[#allocation8 + $0x10] sm:$0xff]
        %v476 = vld [vmem:[#allocation8 + $0x18] sm:$0xff]
        %v477 = vld [vmem:[#allocation8 + $0x20] sm:$0xff]
        %v478 = vld [vmem:[#allocation8 + $0x28] sm:$0xff]
        %v479 = vld [vmem:[#allocation8 + $0x30] sm:$0xff]
        %v480 = vld [vmem:[#allocation8 + $0x38] sm:$0xff]
        %v481 = vld [vmem:[#allocation8 + $0x40] sm:$0xff]
        %v482 = vld [vmem:[#allocation8 + $0x48] sm:$0xff]
        %v483 = vld [vmem:[#allocation8 + $0x50] sm:$0xff]
        %v484 = vld [vmem:[#allocation8 + $0x58] sm:$0xff]
        %v485 = vld [vmem:[#allocation8 + $0x60] sm:$0xff]
        %v486 = vld [vmem:[#allocation8 + $0x68] sm:$0xff]
        %v487 = vld [vmem:[#allocation8 + $0x70] sm:$0xff]
        %v488 = vld [vmem:[#allocation8 + $0x78] sm:$0xff]
        %v489 = vld [vmem:[#allocation8 + $0x80] sm:$0xff]
        %v490 = vld [vmem:[#allocation8 + $0x88] sm:$0xff]
        %v491 = vld [vmem:[#allocation8 + $0x90] sm:$0xff]
        %v492 = vld [vmem:[#allocation8 + $0x98] sm:$0xff]
        %v493 = vld [vmem:[#allocation8 + $0xa0] sm:$0xff]
        %v494 = vld [vmem:[#allocation8 + $0xa8] sm:$0xff]
        %v495 = vld [vmem:[#allocation8 + $0xb0] sm:$0xff]
        %v496 = vld [vmem:[#allocation8 + $0xb8] sm:$0xff]
        %v497 = vld [vmem:[#allocation8 + $0xc0] sm:$0xff]
        %v498 = vld [vmem:[#allocation8 + $0xc8] sm:$0xff]
        %v499 = vld [vmem:[#allocation8 + $0xd0] sm:$0xff]
        %v500 = vld [vmem:[#allocation8 + $0xd8] sm:$0xff]
        %v501 = vld [vmem:[#allocation8 + $0xe0] sm:$0xff]
        %v502 = vld [vmem:[#allocation8 + $0xe8] sm:$0xff]
        %v503 = vld [vmem:[#allocation8 + $0xf0] sm:$0xff]
        %v504 = vld [vmem:[#allocation8 + $0xf8] sm:$0xff]
        %v505 = vld [vmem:[#allocation8 + $0x100] sm:$0xff]
        %v506 = vld [vmem:[#allocation8 + $0x108] sm:$0xff]
        %v507 = vld [vmem:[#allocation8 + $0x110] sm:$0xff]
        %v508 = vld [vmem:[#allocation8 + $0x118] sm:$0xff]
        %v509 = vld [vmem:[#allocation8 + $0x120] sm:$0xff]
        %v510 = vld [vmem:[#allocation8 + $0x128] sm:$0xff]
        %v511 = vld [vmem:[#allocation8 + $0x130] sm:$0xff]
        %v512 = vld [vmem:[#allocation8 + $0x138] sm:$0xff]
        %v513 = vld [vmem:[#allocation8 + $0x140] sm:$0xff]
        %v514 = vld [vmem:[#allocation8 + $0x148] sm:$0xff]
        %v515 = vld [vmem:[#allocation8 + $0x150] sm:$0xff]
        %v516 = vld [vmem:[#allocation8 + $0x158] sm:$0xff]
        %v517 = vld [vmem:[#allocation8 + $0x160] sm:$0xff]
        %v518 = vld [vmem:[#allocation8 + $0x168] sm:$0xff]
        %v519 = vld [vmem:[#allocation8 + $0x170] sm:$0xff]
        %v520 = vld [vmem:[#allocation8 + $0x178] sm:$0xff]
        %v521 = vld [vmem:[#allocation8 + $0x180] sm:$0xff]
        %v522 = vld [vmem:[#allocation8 + $0x188] sm:$0xff]
        %v523 = vld [vmem:[#allocation8 + $0x190] sm:$0xff]
        %v524 = vld [vmem:[#allocation8 + $0x198] sm:$0xff]
        %v525 = vld [vmem:[#allocation8 + $0x1a0] sm:$0xff]
        %v526 = vld [vmem:[#allocation8 + $0x1a8] sm:$0xff]
        %v527 = vld [vmem:[#allocation8 + $0x1b0] sm:$0xff]
        %v528 = vld [vmem:[#allocation8 + $0x1b8] sm:$0xff]
        %v529 = vld [vmem:[#allocation8 + $0x1c0] sm:$0xff]
        %v530 = vld [vmem:[#allocation8 + $0x1c8] sm:$0xff]
        %v531 = vld [vmem:[#allocation8 + $0x1d0] sm:$0xff]
        %v532 = vld [vmem:[#allocation8 + $0x1d8] sm:$0xff]
        %v533 = vld [vmem:[#allocation8 + $0x1e0] sm:$0xff]
        %v534 = vld [vmem:[#allocation8 + $0x1e8] sm:$0xff]
        %v535 = vld [vmem:[#allocation8 + $0x1f0] sm:$0xff]
        %v536 = vld [vmem:[#allocation8 + $0x1f8] sm:$0xff]
        %v537 = vld [vmem:[#allocation8 + $0x200] sm:$0xff]
        %v538 = vld [vmem:[#allocation8 + $0x208] sm:$0xff]
        %v539 = vld [vmem:[#allocation8 + $0x210] sm:$0xff]
        %v540 = vld [vmem:[#allocation8 + $0x218] sm:$0xff]
        %v541 = vld [vmem:[#allocation8 + $0x220] sm:$0xff]
        %v542 = vld [vmem:[#allocation8 + $0x228] sm:$0xff]
        %v543 = vld [vmem:[#allocation8 + $0x230] sm:$0xff]
        %v544 = vld [vmem:[#allocation8 + $0x238] sm:$0xff]
        %v545 = vld [vmem:[#allocation8 + $0x240] sm:$0xff]
        %v546 = vld [vmem:[#allocation8 + $0x248] sm:$0xff]
        %v547 = vld [vmem:[#allocation8 + $0x250] sm:$0xff]
        %v548 = vld [vmem:[#allocation8 + $0x258] sm:$0xff]
        %v549 = vld [vmem:[#allocation8 + $0x260] sm:$0xff]
        %v550 = vld [vmem:[#allocation8 + $0x268] sm:$0xff]
        %v551 = vld [vmem:[#allocation8 + $0x270] sm:$0xff]
        %v552 = vld [vmem:[#allocation8 + $0x278] sm:$0xff]
        %v553 = vld [vmem:[#allocation8 + $0x280] sm:$0xff]
        %v554 = vld [vmem:[#allocation8 + $0x288] sm:$0xff]
        %v555 = vld [vmem:[#allocation8 + $0x290] sm:$0xff]
        %v556 = vld [vmem:[#allocation8 + $0x298] sm:$0xff]
        %v557 = vld [vmem:[#allocation8 + $0x2a0] sm:$0xff]
        %v558 = vld [vmem:[#allocation8 + $0x2a8] sm:$0xff]
        %v559 = vld [vmem:[#allocation8 + $0x2b0] sm:$0xff]
        %v560 = vld [vmem:[#allocation8 + $0x2b8] sm:$0xff]
        %v561 = vld [vmem:[#allocation8 + $0x2c0] sm:$0xff]
        %v562 = vld [vmem:[#allocation8 + $0x2c8] sm:$0xff]
        %v563 = vld [vmem:[#allocation8 + $0x2d0] sm:$0xff]
        %v564 = vld [vmem:[#allocation8 + $0x2d8] sm:$0xff]
        %v565 = vld [vmem:[#allocation8 + $0x2e0] sm:$0xff]
        %v566 = vld [vmem:[#allocation8 + $0x2e8] sm:$0xff]
        %v567 = vld [vmem:[#allocation8 + $0x2f0] sm:$0xff]
        %v568 = vld [vmem:[#allocation8 + $0x2f8] sm:$0xff]
        %v665 = vunpack.c.l.b16 %v473
        %v666 = vunpack.c.h.b16 %v473
        %v667 = vunpack.c.l.b16 %v474
        %v668 = vunpack.c.h.b16 %v474
        %v669 = vunpack.c.l.b16 %v475
        %v670 = vunpack.c.h.b16 %v475
        %v671 = vunpack.c.l.b16 %v476
        %v672 = vunpack.c.h.b16 %v476
        %v673 = vunpack.c.l.b16 %v477
        %v674 = vunpack.c.h.b16 %v477
        %v675 = vunpack.c.l.b16 %v478
        %v676 = vunpack.c.h.b16 %v478
        %v677 = vunpack.c.l.b16 %v479
        %v678 = vunpack.c.h.b16 %v479
        %v679 = vunpack.c.l.b16 %v480
        %v680 = vunpack.c.h.b16 %v480
        %v681 = vunpack.c.l.b16 %v481
        %v682 = vunpack.c.h.b16 %v481
        %v683 = vunpack.c.l.b16 %v482
        %v684 = vunpack.c.h.b16 %v482
        %v685 = vunpack.c.l.b16 %v483
        %v686 = vunpack.c.h.b16 %v483
        %v687 = vunpack.c.l.b16 %v484
        %v688 = vunpack.c.h.b16 %v484
        %v689 = vunpack.c.l.b16 %v485
        %v690 = vunpack.c.h.b16 %v485
        %v691 = vunpack.c.l.b16 %v486
        %v692 = vunpack.c.h.b16 %v486
        %v693 = vunpack.c.l.b16 %v487
        %v694 = vunpack.c.h.b16 %v487
        %v695 = vunpack.c.l.b16 %v488
        %v696 = vunpack.c.h.b16 %v488
        %v697 = vunpack.c.l.b16 %v489
        %v698 = vunpack.c.h.b16 %v489
        %v699 = vunpack.c.l.b16 %v490
        %v700 = vunpack.c.h.b16 %v490
        %v701 = vunpack.c.l.b16 %v491
        %v702 = vunpack.c.h.b16 %v491
        %v703 = vunpack.c.l.b16 %v492
        %v704 = vunpack.c.h.b16 %v492
        %v705 = vunpack.c.l.b16 %v493
        %v706 = vunpack.c.h.b16 %v493
        %v707 = vunpack.c.l.b16 %v494
        %v708 = vunpack.c.h.b16 %v494
        %v709 = vunpack.c.l.b16 %v495
        %v710 = vunpack.c.h.b16 %v495
        %v711 = vunpack.c.l.b16 %v496
        %v712 = vunpack.c.h.b16 %v496
        %v713 = vunpack.c.l.b16 %v497
        %v714 = vunpack.c.h.b16 %v497
        %v715 = vunpack.c.l.b16 %v498
        %v716 = vunpack.c.h.b16 %v498
        %v717 = vunpack.c.l.b16 %v499
        %v718 = vunpack.c.h.b16 %v499
        %v719 = vunpack.c.l.b16 %v500
        %v720 = vunpack.c.h.b16 %v500
        %v721 = vunpack.c.l.b16 %v501
        %v722 = vunpack.c.h.b16 %v501
        %v723 = vunpack.c.l.b16 %v502
        %v724 = vunpack.c.h.b16 %v502
        %v725 = vunpack.c.l.b16 %v503
        %v726 = vunpack.c.h.b16 %v503
        %v727 = vunpack.c.l.b16 %v504
        %v728 = vunpack.c.h.b16 %v504
        %v729 = vunpack.c.l.b16 %v505
        %v730 = vunpack.c.h.b16 %v505
        %v731 = vunpack.c.l.b16 %v506
        %v732 = vunpack.c.h.b16 %v506
        %v733 = vunpack.c.l.b16 %v507
        %v734 = vunpack.c.h.b16 %v507
        %v735 = vunpack.c.l.b16 %v508
        %v736 = vunpack.c.h.b16 %v508
        %v737 = vunpack.c.l.b16 %v509
        %v738 = vunpack.c.h.b16 %v509
        %v739 = vunpack.c.l.b16 %v510
        %v740 = vunpack.c.h.b16 %v510
        %v741 = vunpack.c.l.b16 %v511
        %v742 = vunpack.c.h.b16 %v511
        %v743 = vunpack.c.l.b16 %v512
        %v744 = vunpack.c.h.b16 %v512
        %v745 = vunpack.c.l.b16 %v513
        %v746 = vunpack.c.h.b16 %v513
        %v747 = vunpack.c.l.b16 %v514
        %v748 = vunpack.c.h.b16 %v514
        %v749 = vunpack.c.l.b16 %v515
        %v750 = vunpack.c.h.b16 %v515
        %v751 = vunpack.c.l.b16 %v516
        %v752 = vunpack.c.h.b16 %v516
        %v753 = vunpack.c.l.b16 %v517
        %v754 = vunpack.c.h.b16 %v517
        %v755 = vunpack.c.l.b16 %v518
        %v756 = vunpack.c.h.b16 %v518
        %v757 = vunpack.c.l.b16 %v519
        %v758 = vunpack.c.h.b16 %v519
        %v759 = vunpack.c.l.b16 %v520
        %v760 = vunpack.c.h.b16 %v520
        %v761 = vunpack.c.l.b16 %v521
        %v762 = vunpack.c.h.b16 %v521
        %v763 = vunpack.c.l.b16 %v522
        %v764 = vunpack.c.h.b16 %v522
        %v765 = vunpack.c.l.b16 %v523
        %v766 = vunpack.c.h.b16 %v523
        %v767 = vunpack.c.l.b16 %v524
        %v768 = vunpack.c.h.b16 %v524
        %v769 = vunpack.c.l.b16 %v525
        %v770 = vunpack.c.h.b16 %v525
        %v771 = vunpack.c.l.b16 %v526
        %v772 = vunpack.c.h.b16 %v526
        %v773 = vunpack.c.l.b16 %v527
        %v774 = vunpack.c.h.b16 %v527
        %v775 = vunpack.c.l.b16 %v528
        %v776 = vunpack.c.h.b16 %v528
        %v777 = vunpack.c.l.b16 %v529
        %v778 = vunpack.c.h.b16 %v529
        %v779 = vunpack.c.l.b16 %v530
        %v780 = vunpack.c.h.b16 %v530
        %v781 = vunpack.c.l.b16 %v531
        %v782 = vunpack.c.h.b16 %v531
        %v783 = vunpack.c.l.b16 %v532
        %v784 = vunpack.c.h.b16 %v532
        %v785 = vunpack.c.l.b16 %v533
        %v786 = vunpack.c.h.b16 %v533
        %v787 = vunpack.c.l.b16 %v534
        %v788 = vunpack.c.h.b16 %v534
        %v789 = vunpack.c.l.b16 %v535
        %v790 = vunpack.c.h.b16 %v535
        %v791 = vunpack.c.l.b16 %v536
        %v792 = vunpack.c.h.b16 %v536
        %v793 = vunpack.c.l.b16 %v537
        %v794 = vunpack.c.h.b16 %v537
        %v795 = vunpack.c.l.b16 %v538
        %v796 = vunpack.c.h.b16 %v538
        %v797 = vunpack.c.l.b16 %v539
        %v798 = vunpack.c.h.b16 %v539
        %v799 = vunpack.c.l.b16 %v540
        %v800 = vunpack.c.h.b16 %v540
        %v801 = vunpack.c.l.b16 %v541
        %v802 = vunpack.c.h.b16 %v541
        %v803 = vunpack.c.l.b16 %v542
        %v804 = vunpack.c.h.b16 %v542
        %v805 = vunpack.c.l.b16 %v543
        %v806 = vunpack.c.h.b16 %v543
        %v807 = vunpack.c.l.b16 %v544
        %v808 = vunpack.c.h.b16 %v544
        %v809 = vunpack.c.l.b16 %v545
        %v810 = vunpack.c.h.b16 %v545
        %v811 = vunpack.c.l.b16 %v546
        %v812 = vunpack.c.h.b16 %v546
        %v813 = vunpack.c.l.b16 %v547
        %v814 = vunpack.c.h.b16 %v547
        %v815 = vunpack.c.l.b16 %v548
        %v816 = vunpack.c.h.b16 %v548
        %v817 = vunpack.c.l.b16 %v549
        %v818 = vunpack.c.h.b16 %v549
        %v819 = vunpack.c.l.b16 %v550
        %v820 = vunpack.c.h.b16 %v550
        %v821 = vunpack.c.l.b16 %v551
        %v822 = vunpack.c.h.b16 %v551
        %v823 = vunpack.c.l.b16 %v552
        %v824 = vunpack.c.h.b16 %v552
        %v825 = vunpack.c.l.b16 %v553
        %v826 = vunpack.c.h.b16 %v553
        %v827 = vunpack.c.l.b16 %v554
        %v828 = vunpack.c.h.b16 %v554
        %v829 = vunpack.c.l.b16 %v555
        %v830 = vunpack.c.h.b16 %v555
        %v831 = vunpack.c.l.b16 %v556
        %v832 = vunpack.c.h.b16 %v556
        %v833 = vunpack.c.l.b16 %v557
        %v834 = vunpack.c.h.b16 %v557
        %v835 = vunpack.c.l.b16 %v558
        %v836 = vunpack.c.h.b16 %v558
        %v837 = vunpack.c.l.b16 %v559
        %v838 = vunpack.c.h.b16 %v559
        %v839 = vunpack.c.l.b16 %v560
        %v840 = vunpack.c.h.b16 %v560
        %v841 = vunpack.c.l.b16 %v561
        %v842 = vunpack.c.h.b16 %v561
        %v843 = vunpack.c.l.b16 %v562
        %v844 = vunpack.c.h.b16 %v562
        %v845 = vunpack.c.l.b16 %v563
        %v846 = vunpack.c.h.b16 %v563
        %v847 = vunpack.c.l.b16 %v564
        %v848 = vunpack.c.h.b16 %v564
        %v849 = vunpack.c.l.b16 %v565
        %v850 = vunpack.c.h.b16 %v565
        %v851 = vunpack.c.l.b16 %v566
        %v852 = vunpack.c.h.b16 %v566
        %v853 = vunpack.c.l.b16 %v567
        %v854 = vunpack.c.h.b16 %v567
        %v855 = vunpack.c.l.b16 %v568
        %v856 = vunpack.c.h.b16 %v568
        %v857 = vpack.c.b16 %v671, %v665
        %v858 = vpack.c.b16 %v672, %v666
        %v859 = vpack.c.b16 %v673, %v667
        %v860 = vpack.c.b16 %v674, %v668
        %v861 = vpack.c.b16 %v675, %v669
        %v862 = vpack.c.b16 %v676, %v670
        %v863 = vpack.c.b16 %v683, %v677
        %v864 = vpack.c.b16 %v684, %v678
        %v865 = vpack.c.b16 %v685, %v679
        %v866 = vpack.c.b16 %v686, %v680
        %v867 = vpack.c.b16 %v687, %v681
        %v868 = vpack.c.b16 %v688, %v682
        %v869 = vpack.c.b16 %v695, %v689
        %v870 = vpack.c.b16 %v696, %v690
        %v871 = vpack.c.b16 %v697, %v691
        %v872 = vpack.c.b16 %v698, %v692
        %v873 = vpack.c.b16 %v699, %v693
        %v874 = vpack.c.b16 %v700, %v694
        %v875 = vpack.c.b16 %v707, %v701
        %v876 = vpack.c.b16 %v708, %v702
        %v877 = vpack.c.b16 %v709, %v703
        %v878 = vpack.c.b16 %v710, %v704
        %v879 = vpack.c.b16 %v711, %v705
        %v880 = vpack.c.b16 %v712, %v706
        %v881 = vpack.c.b16 %v719, %v713
        %v882 = vpack.c.b16 %v720, %v714
        %v883 = vpack.c.b16 %v721, %v715
        %v884 = vpack.c.b16 %v722, %v716
        %v885 = vpack.c.b16 %v723, %v717
        %v886 = vpack.c.b16 %v724, %v718
        %v887 = vpack.c.b16 %v731, %v725
        %v888 = vpack.c.b16 %v732, %v726
        %v889 = vpack.c.b16 %v733, %v727
        %v890 = vpack.c.b16 %v734, %v728
        %v891 = vpack.c.b16 %v735, %v729
        %v892 = vpack.c.b16 %v736, %v730
        %v893 = vpack.c.b16 %v743, %v737
        %v894 = vpack.c.b16 %v744, %v738
        %v895 = vpack.c.b16 %v745, %v739
        %v896 = vpack.c.b16 %v746, %v740
        %v897 = vpack.c.b16 %v747, %v741
        %v898 = vpack.c.b16 %v748, %v742
        %v899 = vpack.c.b16 %v755, %v749
        %v900 = vpack.c.b16 %v756, %v750
        %v901 = vpack.c.b16 %v757, %v751
        %v902 = vpack.c.b16 %v758, %v752
        %v903 = vpack.c.b16 %v759, %v753
        %v904 = vpack.c.b16 %v760, %v754
        %v905 = vpack.c.b16 %v767, %v761
        %v906 = vpack.c.b16 %v768, %v762
        %v907 = vpack.c.b16 %v769, %v763
        %v908 = vpack.c.b16 %v770, %v764
        %v909 = vpack.c.b16 %v771, %v765
        %v910 = vpack.c.b16 %v772, %v766
        %v911 = vpack.c.b16 %v779, %v773
        %v912 = vpack.c.b16 %v780, %v774
        %v913 = vpack.c.b16 %v781, %v775
        %v914 = vpack.c.b16 %v782, %v776
        %v915 = vpack.c.b16 %v783, %v777
        %v916 = vpack.c.b16 %v784, %v778
        %v917 = vpack.c.b16 %v791, %v785
        %v918 = vpack.c.b16 %v792, %v786
        %v919 = vpack.c.b16 %v793, %v787
        %v920 = vpack.c.b16 %v794, %v788
        %v921 = vpack.c.b16 %v795, %v789
        %v922 = vpack.c.b16 %v796, %v790
        %v923 = vpack.c.b16 %v803, %v797
        %v924 = vpack.c.b16 %v804, %v798
        %v925 = vpack.c.b16 %v805, %v799
        %v926 = vpack.c.b16 %v806, %v800
        %v927 = vpack.c.b16 %v807, %v801
        %v928 = vpack.c.b16 %v808, %v802
        %v929 = vpack.c.b16 %v815, %v809
        %v930 = vpack.c.b16 %v816, %v810
        %v931 = vpack.c.b16 %v817, %v811
        %v932 = vpack.c.b16 %v818, %v812
        %v933 = vpack.c.b16 %v819, %v813
        %v934 = vpack.c.b16 %v820, %v814
        %v935 = vpack.c.b16 %v827, %v821
        %v936 = vpack.c.b16 %v828, %v822
        %v937 = vpack.c.b16 %v829, %v823
        %v938 = vpack.c.b16 %v830, %v824
        %v939 = vpack.c.b16 %v831, %v825
        %v940 = vpack.c.b16 %v832, %v826
        %v941 = vpack.c.b16 %v839, %v833
        %v942 = vpack.c.b16 %v840, %v834
        %v943 = vpack.c.b16 %v841, %v835
        %v944 = vpack.c.b16 %v842, %v836
        %v945 = vpack.c.b16 %v843, %v837
        %v946 = vpack.c.b16 %v844, %v838
        %v947 = vpack.c.b16 %v851, %v845
        %v948 = vpack.c.b16 %v852, %v846
        %v949 = vpack.c.b16 %v853, %v847
        %v950 = vpack.c.b16 %v854, %v848
        %v951 = vpack.c.b16 %v855, %v849
        %v952 = vpack.c.b16 %v856, %v850
        %1049 = vmatpush.bf16.msra.mxu0 %v899
        %1050 = vmatpush.bf16.msra.mxu0 %v893
        %1051 = vmatpush.bf16.msra.mxu0 %v887
        %1052 = vmatpush.bf16.msra.mxu0 %v881
        %1053 = vmatpush.bf16.msra.mxu0 %v875
        %1054 = vmatpush.bf16.msra.mxu0 %v869
        %1055 = vmatpush.bf16.msra.mxu0 %v863
        %1056 = vmatpush.bf16.msra.mxu0 %v857
        %1057 = vmatmul.bf16.gmra.mxu0 %v471
        %v1058 = vpop.f32.mrf.mxu0
        %v1059 = vadd.f32 0.0, %v1058
        %v1060 = vpop.f32.mrf.mxu0
        %1061 = vdwg.mxu0
        %1062 = vmatpush.bf16.msra.mxu0 %v947
        %1063 = vmatpush.bf16.msra.mxu0 %v941
        %1064 = vmatpush.bf16.msra.mxu0 %v935
        %1065 = vmatpush.bf16.msra.mxu0 %v929
        %1066 = vmatpush.bf16.msra.mxu0 %v923
        %1067 = vmatpush.bf16.msra.mxu0 %v917
        %1068 = vmatpush.bf16.msra.mxu0 %v911
        %1069 = vmatpush.bf16.msra.mxu0 %v905
        %1070 = vmatmul.bf16.gmra.mxu0 %v472
        %v1071 = vpop.f32.mrf.mxu0
        %v1072 = vadd.f32 %v1059, %v1071
        %v1073 = vpop.f32.mrf.mxu0
        %1074 = vdwg.mxu0
        %1075 = vmatpush.bf16.msra.mxu0 %v900
        %1076 = vmatpush.bf16.msra.mxu0 %v894
        %1077 = vmatpush.bf16.msra.mxu0 %v888
        %1078 = vmatpush.bf16.msra.mxu0 %v882
        %1079 = vmatpush.bf16.msra.mxu0 %v876
        %1080 = vmatpush.bf16.msra.mxu0 %v870
        %1081 = vmatpush.bf16.msra.mxu0 %v864
        %1082 = vmatpush.bf16.msra.mxu0 %v858
        %1083 = vmatmul.bf16.gmra.mxu0 %v471
        %v1084 = vpop.f32.mrf.mxu0
        %v1085 = vadd.f32 0.0, %v1084
        %v1086 = vpop.f32.mrf.mxu0
        %1087 = vdwg.mxu0
        %1088 = vmatpush.bf16.msra.mxu0 %v948
        %1089 = vmatpush.bf16.msra.mxu0 %v942
        %1090 = vmatpush.bf16.msra.mxu0 %v936
        %1091 = vmatpush.bf16.msra.mxu0 %v930
        %1092 = vmatpush.bf16.msra.mxu0 %v924
        %1093 = vmatpush.bf16.msra.mxu0 %v918
        %1094 = vmatpush.bf16.msra.mxu0 %v912
        %1095 = vmatpush.bf16.msra.mxu0 %v906
        %1096 = vmatmul.bf16.gmra.mxu0 %v472
        %v1097 = vpop.f32.mrf.mxu0
        %v1098 = vadd.f32 %v1085, %v1097
        %v1099 = vpop.f32.mrf.mxu0
        %1100 = vdwg.mxu0
        %1101 = vmatpush.bf16.msra.mxu0 %v901
        %1102 = vmatpush.bf16.msra.mxu0 %v895
        %1103 = vmatpush.bf16.msra.mxu0 %v889
        %1104 = vmatpush.bf16.msra.mxu0 %v883
        %1105 = vmatpush.bf16.msra.mxu0 %v877
        %1106 = vmatpush.bf16.msra.mxu0 %v871
        %1107 = vmatpush.bf16.msra.mxu0 %v865
        %1108 = vmatpush.bf16.msra.mxu0 %v859
        %1109 = vmatmul.bf16.gmra.mxu0 %v471
        %v1110 = vpop.f32.mrf.mxu0
        %v1111 = vadd.f32 0.0, %v1110
        %v1112 = vpop.f32.mrf.mxu0
        %1113 = vdwg.mxu0
        %1114 = vmatpush.bf16.msra.mxu0 %v949
        %1115 = vmatpush.bf16.msra.mxu0 %v943
        %1116 = vmatpush.bf16.msra.mxu0 %v937
        %1117 = vmatpush.bf16.msra.mxu0 %v931
        %1118 = vmatpush.bf16.msra.mxu0 %v925
        %1119 = vmatpush.bf16.msra.mxu0 %v919
        %1120 = vmatpush.bf16.msra.mxu0 %v913
        %1121 = vmatpush.bf16.msra.mxu0 %v907
        %1122 = vmatmul.bf16.gmra.mxu0 %v472
        %v1123 = vpop.f32.mrf.mxu0
        %v1124 = vadd.f32 %v1111, %v1123
        %v1125 = vpop.f32.mrf.mxu0
        %1126 = vdwg.mxu0
        %1127 = vmatpush.bf16.msra.mxu0 %v902
        %1128 = vmatpush.bf16.msra.mxu0 %v896
        %1129 = vmatpush.bf16.msra.mxu0 %v890
        %1130 = vmatpush.bf16.msra.mxu0 %v884
        %1131 = vmatpush.bf16.msra.mxu0 %v878
        %1132 = vmatpush.bf16.msra.mxu0 %v872
        %1133 = vmatpush.bf16.msra.mxu0 %v866
        %1134 = vmatpush.bf16.msra.mxu0 %v860
        %1135 = vmatmul.bf16.gmra.mxu0 %v471
        %v1136 = vpop.f32.mrf.mxu0
        %v1137 = vadd.f32 0.0, %v1136
        %v1138 = vpop.f32.mrf.mxu0
        %1139 = vdwg.mxu0
        %1140 = vmatpush.bf16.msra.mxu0 %v950
        %1141 = vmatpush.bf16.msra.mxu0 %v944
        %1142 = vmatpush.bf16.msra.mxu0 %v938
        %1143 = vmatpush.bf16.msra.mxu0 %v932
        %1144 = vmatpush.bf16.msra.mxu0 %v926
        %1145 = vmatpush.bf16.msra.mxu0 %v920
        %1146 = vmatpush.bf16.msra.mxu0 %v914
        %1147 = vmatpush.bf16.msra.mxu0 %v908
        %1148 = vmatmul.bf16.gmra.mxu0 %v472
        %v1149 = vpop.f32.mrf.mxu0
        %v1150 = vadd.f32 %v1137, %v1149
        %v1151 = vpop.f32.mrf.mxu0
        %1152 = vdwg.mxu0
        %1153 = vmatpush.bf16.msra.mxu0 %v903
        %1154 = vmatpush.bf16.msra.mxu0 %v897
        %1155 = vmatpush.bf16.msra.mxu0 %v891
        %1156 = vmatpush.bf16.msra.mxu0 %v885
        %1157 = vmatpush.bf16.msra.mxu0 %v879
        %1158 = vmatpush.bf16.msra.mxu0 %v873
        %1159 = vmatpush.bf16.msra.mxu0 %v867
        %1160 = vmatpush.bf16.msra.mxu0 %v861
        %1161 = vmatmul.bf16.gmra.mxu0 %v471
        %v1162 = vpop.f32.mrf.mxu0
        %v1163 = vadd.f32 0.0, %v1162
        %v1164 = vpop.f32.mrf.mxu0
        %1165 = vdwg.mxu0
        %1166 = vmatpush.bf16.msra.mxu0 %v951
        %1167 = vmatpush.bf16.msra.mxu0 %v945
        %1168 = vmatpush.bf16.msra.mxu0 %v939
        %1169 = vmatpush.bf16.msra.mxu0 %v933
        %1170 = vmatpush.bf16.msra.mxu0 %v927
        %1171 = vmatpush.bf16.msra.mxu0 %v921
        %1172 = vmatpush.bf16.msra.mxu0 %v915
        %1173 = vmatpush.bf16.msra.mxu0 %v909
        %1174 = vmatmul.bf16.gmra.mxu0 %v472
        %v1175 = vpop.f32.mrf.mxu0
        %v1176 = vadd.f32 %v1163, %v1175
        %v1177 = vpop.f32.mrf.mxu0
        %1178 = vdwg.mxu0
        %1179 = vmatpush.bf16.msra.mxu0 %v904
        %1180 = vmatpush.bf16.msra.mxu0 %v898
        %1181 = vmatpush.bf16.msra.mxu0 %v892
        %1182 = vmatpush.bf16.msra.mxu0 %v886
        %1183 = vmatpush.bf16.msra.mxu0 %v880
        %1184 = vmatpush.bf16.msra.mxu0 %v874
        %1185 = vmatpush.bf16.msra.mxu0 %v868
        %1186 = vmatpush.bf16.msra.mxu0 %v862
        %1187 = vmatmul.bf16.gmra.mxu0 %v471
        %v1188 = vpop.f32.mrf.mxu0
        %v1189 = vadd.f32 0.0, %v1188
        %v1190 = vpop.f32.mrf.mxu0
        %1191 = vdwg.mxu0
        %1192 = vmatpush.bf16.msra.mxu0 %v952
        %1193 = vmatpush.bf16.msra.mxu0 %v946
        %1194 = vmatpush.bf16.msra.mxu0 %v940
        %1195 = vmatpush.bf16.msra.mxu0 %v934
        %1196 = vmatpush.bf16.msra.mxu0 %v928
        %1197 = vmatpush.bf16.msra.mxu0 %v922
        %1198 = vmatpush.bf16.msra.mxu0 %v916
        %1199 = vmatpush.bf16.msra.mxu0 %v910
        %1200 = vmatmul.bf16.gmra.mxu0 %v472
        %v1201 = vpop.f32.mrf.mxu0
        %v1202 = vadd.f32 %v1189, %v1201
        %v1203 = vpop.f32.mrf.mxu0
        %1204 = vdwg.mxu0
        %v1205 = vpack.c.bf16 %v1072, %v1072
        %v1206 = vpack.c.bf16 %v1124, %v1124
        %v1207 = vpack.c.bf16 %v1176, %v1176
        %1208 = vmatpush.bf16.xpose.msra.mxu0 0
        %1209 = vmatpush.bf16.xpose.msra.mxu0 0
        %1210 = vmatpush.bf16.xpose.msra.mxu0 0
        %1211 = vmatpush.bf16.xpose.msra.mxu0 0
        %1212 = vmatpush.bf16.xpose.msra.mxu0 0
        %1213 = vmatpush.bf16.xpose.msra.mxu0 0
        %1214 = vmatpush.bf16.xpose.msra.mxu0 0
        %1215 = vmatpush.bf16.xpose.msra.mxu0 %v1206
        %1216 = vmatmul.bf16.gmra.mxu0 %v1205
        %v1217 = vpop.f32.mrf.mxu0
        %v1218 = vadd.f32 0.0, %v1217
        %v1219 = vpop.f32.mrf.mxu0
        %1220 = vdwg.mxu0
        %vm1221 = vcmask 64512
        %v1222 = vsel %vm1221, %v1218, -inf
        %1223 = vmax.xlane.f32.xlu0 %v1222
        %v1224 = vpop.xlane.xlu0 %1223
        %v1225 = vsub.f32 %v1218, %v1224
        %v1226 = vmul.f32 %v1225, 1.442695
        %v1227 = vpow.pop %v1226
        %v1228 = vsel %vm1221, %v1227, 0.0
        %1229 = vadd.xlane.f32.xlu0 %v1228
        %v1230 = vpop.xlane.xlu0 %1229
        %v1231 = vpack.c.bf16 %v1227, %v1227
        %v1233 = vsel %vm1221, %v1231, 0
        %vm1235 = vcmask 1043456
        %v1237 = vsel %vm1235, %v1207, 0
        %1239 = vmatpush.bf16.msra.mxu0 0
        %1240 = vmatpush.bf16.msra.mxu0 0
        %1241 = vmatpush.bf16.msra.mxu0 0
        %1242 = vmatpush.bf16.msra.mxu0 0
        %1243 = vmatpush.bf16.msra.mxu0 0
        %1244 = vmatpush.bf16.msra.mxu0 0
        %1245 = vmatpush.bf16.msra.mxu0 0
        %1246 = vmatpush.bf16.msra.mxu0 %v1237
        %1247 = vmatmul.bf16.gmra.mxu0 %v1233
        %v1248 = vpop.f32.mrf.mxu0
        %v1249 = vadd.f32 0.0, %v1248
        %v1250 = vpop.f32.mrf.mxu0
        %1251 = vdwg.mxu0
        %v1252 = vrcp.pop %v1230
        %v1253 = vmul.f32 %v1249, %v1252
        %v1254 = vpack.c.bf16 %v1253, %v1253
        %1255 = vst [vmem:[#allocation2] sm:$0xf] %v1254
        %v1256 = vpack.c.bf16 %v1098, %v1098
        %v1257 = vpack.c.bf16 %v1150, %v1150
        %v1258 = vpack.c.bf16 %v1202, %v1202
        %1259 = vmatpush.bf16.xpose.msra.mxu0 0
        %1260 = vmatpush.bf16.xpose.msra.mxu0 0
        %1261 = vmatpush.bf16.xpose.msra.mxu0 0
        %1262 = vmatpush.bf16.xpose.msra.mxu0 0
        %1263 = vmatpush.bf16.xpose.msra.mxu0 0
        %1264 = vmatpush.bf16.xpose.msra.mxu0 0
        %1265 = vmatpush.bf16.xpose.msra.mxu0 0
        %1266 = vmatpush.bf16.xpose.msra.mxu0 %v1257
        %1267 = vmatmul.bf16.gmra.mxu0 %v1256
        %v1268 = vpop.f32.mrf.mxu0
        %v1269 = vadd.f32 0.0, %v1268
        %v1270 = vpop.f32.mrf.mxu0
        %1271 = vdwg.mxu0
        %v1272 = vsel %vm1221, %v1269, -inf
        %1273 = vmax.xlane.f32.xlu0 %v1272
        %v1274 = vpop.xlane.xlu0 %1273
        %v1275 = vsub.f32 %v1269, %v1274
        %v1276 = vmul.f32 %v1275, 1.442695
        %v1277 = vpow.pop %v1276
        %v1278 = vsel %vm1221, %v1277, 0.0
        %1279 = vadd.xlane.f32.xlu0 %v1278
        %v1280 = vpop.xlane.xlu0 %1279
        %v1281 = vpack.c.bf16 %v1277, %v1277
        %v1283 = vsel %vm1221, %v1281, 0
        %v1286 = vsel %vm1235, %v1258, 0
        %1288 = vmatpush.bf16.msra.mxu0 0
        %1289 = vmatpush.bf16.msra.mxu0 0
        %1290 = vmatpush.bf16.msra.mxu0 0
        %1291 = vmatpush.bf16.msra.mxu0 0
        %1292 = vmatpush.bf16.msra.mxu0 0
        %1293 = vmatpush.bf16.msra.mxu0 0
        %1294 = vmatpush.bf16.msra.mxu0 0
        %1295 = vmatpush.bf16.msra.mxu0 %v1286
        %1296 = vmatmul.bf16.gmra.mxu0 %v1283
        %v1297 = vpop.f32.mrf.mxu0
        %v1298 = vadd.f32 0.0, %v1297
        %v1299 = vpop.f32.mrf.mxu0
        %1300 = vdwg.mxu0
        %v1301 = vrcp.pop %v1280
        %v1302 = vmul.f32 %v1298, %v1301
        %v1303 = vpack.c.bf16 %v1302, %v1302
        %1304 = vst [vmem:[#allocation2 + $0x4] sm:$0xf] %v1303
        %v1305 = vld [vmem:[#allocation2] sm:$0xff]
        %v1306 = vld [vmem:[#allocation9] sm:$0xff]
        %v1307 = vld [vmem:[#allocation9 + $0x8] sm:$0xff]
        %v1308 = vld [vmem:[#allocation9 + $0x10] sm:$0xff]
        %v1309 = vld [vmem:[#allocation9 + $0x18] sm:$0xff]
        %v1310 = vld [vmem:[#allocation9 + $0x20] sm:$0xff]
        %v1311 = vld [vmem:[#allocation9 + $0x28] sm:$0xff]
        %v1312 = vld [vmem:[#allocation9 + $0x30] sm:$0xff]
        %v1313 = vld [vmem:[#allocation9 + $0x38] sm:$0xff]
        %v1314 = vld [vmem:[#allocation9 + $0x40] sm:$0xff]
        %v1315 = vld [vmem:[#allocation9 + $0x48] sm:$0xff]
        %v1316 = vld [vmem:[#allocation9 + $0x50] sm:$0xff]
        %v1317 = vld [vmem:[#allocation9 + $0x58] sm:$0xff]
        %v1318 = vld [vmem:[#allocation9 + $0x60] sm:$0xff]
        %v1319 = vld [vmem:[#allocation9 + $0x68] sm:$0xff]
        %v1320 = vld [vmem:[#allocation9 + $0x70] sm:$0xff]
        %v1321 = vld [vmem:[#allocation9 + $0x78] sm:$0xff]
        %v1322 = vld [vmem:[#allocation9 + $0x80] sm:$0xff]
        %v1323 = vld [vmem:[#allocation9 + $0x88] sm:$0xff]
        %v1324 = vld [vmem:[#allocation9 + $0x90] sm:$0xff]
        %v1325 = vld [vmem:[#allocation9 + $0x98] sm:$0xff]
        %v1326 = vld [vmem:[#allocation9 + $0xa0] sm:$0xff]
        %v1327 = vld [vmem:[#allocation9 + $0xa8] sm:$0xff]
        %v1328 = vld [vmem:[#allocation9 + $0xb0] sm:$0xff]
        %v1329 = vld [vmem:[#allocation9 + $0xb8] sm:$0xff]
        %v1330 = vld [vmem:[#allocation9 + $0xc0] sm:$0xff]
        %v1331 = vld [vmem:[#allocation9 + $0xc8] sm:$0xff]
        %v1332 = vld [vmem:[#allocation9 + $0xd0] sm:$0xff]
        %v1333 = vld [vmem:[#allocation9 + $0xd8] sm:$0xff]
        %v1334 = vld [vmem:[#allocation9 + $0xe0] sm:$0xff]
        %v1335 = vld [vmem:[#allocation9 + $0xe8] sm:$0xff]
        %v1336 = vld [vmem:[#allocation9 + $0xf0] sm:$0xff]
        %v1337 = vld [vmem:[#allocation9 + $0xf8] sm:$0xff]
        %v1339 = vunpack.c.l.b16 %v1305
        %v1340 = vunpack.c.h.b16 %v1305
        %v1341 = vpack.c.b16 %v1339, %v1339
        %v1342 = vpack.c.b16 %v1340, %v1340
        %v1377 = vunpack.c.l.b16 %v1306
        %v1378 = vunpack.c.h.b16 %v1306
        %v1379 = vunpack.c.l.b16 %v1307
        %v1380 = vunpack.c.h.b16 %v1307
        %v1381 = vunpack.c.l.b16 %v1308
        %v1382 = vunpack.c.h.b16 %v1308
        %v1383 = vunpack.c.l.b16 %v1309
        %v1384 = vunpack.c.h.b16 %v1309
        %v1385 = vunpack.c.l.b16 %v1310
        %v1386 = vunpack.c.h.b16 %v1310
        %v1387 = vunpack.c.l.b16 %v1311
        %v1388 = vunpack.c.h.b16 %v1311
        %v1389 = vunpack.c.l.b16 %v1312
        %v1390 = vunpack.c.h.b16 %v1312
        %v1391 = vunpack.c.l.b16 %v1313
        %v1392 = vunpack.c.h.b16 %v1313
        %v1393 = vunpack.c.l.b16 %v1314
        %v1394 = vunpack.c.h.b16 %v1314
        %v1395 = vunpack.c.l.b16 %v1315
        %v1396 = vunpack.c.h.b16 %v1315
        %v1397 = vunpack.c.l.b16 %v1316
        %v1398 = vunpack.c.h.b16 %v1316
        %v1399 = vunpack.c.l.b16 %v1317
        %v1400 = vunpack.c.h.b16 %v1317
        %v1401 = vunpack.c.l.b16 %v1318
        %v1402 = vunpack.c.h.b16 %v1318
        %v1403 = vunpack.c.l.b16 %v1319
        %v1404 = vunpack.c.h.b16 %v1319
        %v1405 = vunpack.c.l.b16 %v1320
        %v1406 = vunpack.c.h.b16 %v1320
        %v1407 = vunpack.c.l.b16 %v1321
        %v1408 = vunpack.c.h.b16 %v1321
        %v1409 = vunpack.c.l.b16 %v1322
        %v1410 = vunpack.c.h.b16 %v1322
        %v1411 = vunpack.c.l.b16 %v1323
        %v1412 = vunpack.c.h.b16 %v1323
        %v1413 = vunpack.c.l.b16 %v1324
        %v1414 = vunpack.c.h.b16 %v1324
        %v1415 = vunpack.c.l.b16 %v1325
        %v1416 = vunpack.c.h.b16 %v1325
        %v1417 = vunpack.c.l.b16 %v1326
        %v1418 = vunpack.c.h.b16 %v1326
        %v1419 = vunpack.c.l.b16 %v1327
        %v1420 = vunpack.c.h.b16 %v1327
        %v1421 = vunpack.c.l.b16 %v1328
        %v1422 = vunpack.c.h.b16 %v1328
        %v1423 = vunpack.c.l.b16 %v1329
        %v1424 = vunpack.c.h.b16 %v1329
        %v1425 = vunpack.c.l.b16 %v1330
        %v1426 = vunpack.c.h.b16 %v1330
        %v1427 = vunpack.c.l.b16 %v1331
        %v1428 = vunpack.c.h.b16 %v1331
        %v1429 = vunpack.c.l.b16 %v1332
        %v1430 = vunpack.c.h.b16 %v1332
        %v1431 = vunpack.c.l.b16 %v1333
        %v1432 = vunpack.c.h.b16 %v1333
        %v1433 = vunpack.c.l.b16 %v1334
        %v1434 = vunpack.c.h.b16 %v1334
        %v1435 = vunpack.c.l.b16 %v1335
        %v1436 = vunpack.c.h.b16 %v1335
        %v1437 = vunpack.c.l.b16 %v1336
        %v1438 = vunpack.c.h.b16 %v1336
        %v1439 = vunpack.c.l.b16 %v1337
        %v1440 = vunpack.c.h.b16 %v1337
        %v1441 = vpack.c.b16 %v1379, %v1377
        %v1442 = vpack.c.b16 %v1380, %v1378
        %v1443 = vpack.c.b16 %v1383, %v1381
        %v1444 = vpack.c.b16 %v1384, %v1382
        %v1445 = vpack.c.b16 %v1387, %v1385
        %v1446 = vpack.c.b16 %v1388, %v1386
        %v1447 = vpack.c.b16 %v1391, %v1389
        %v1448 = vpack.c.b16 %v1392, %v1390
        %v1449 = vpack.c.b16 %v1395, %v1393
        %v1450 = vpack.c.b16 %v1396, %v1394
        %v1451 = vpack.c.b16 %v1399, %v1397
        %v1452 = vpack.c.b16 %v1400, %v1398
        %v1453 = vpack.c.b16 %v1403, %v1401
        %v1454 = vpack.c.b16 %v1404, %v1402
        %v1455 = vpack.c.b16 %v1407, %v1405
        %v1456 = vpack.c.b16 %v1408, %v1406
        %v1457 = vpack.c.b16 %v1411, %v1409
        %v1458 = vpack.c.b16 %v1412, %v1410
        %v1459 = vpack.c.b16 %v1415, %v1413
        %v1460 = vpack.c.b16 %v1416, %v1414
        %v1461 = vpack.c.b16 %v1419, %v1417
        %v1462 = vpack.c.b16 %v1420, %v1418
        %v1463 = vpack.c.b16 %v1423, %v1421
        %v1464 = vpack.c.b16 %v1424, %v1422
        %v1465 = vpack.c.b16 %v1427, %v1425
        %v1466 = vpack.c.b16 %v1428, %v1426
        %v1467 = vpack.c.b16 %v1431, %v1429
        %v1468 = vpack.c.b16 %v1432, %v1430
        %v1469 = vpack.c.b16 %v1435, %v1433
        %v1470 = vpack.c.b16 %v1436, %v1434
        %v1471 = vpack.c.b16 %v1439, %v1437
        %v1472 = vpack.c.b16 %v1440, %v1438
        %1505 = vmatpush.bf16.msra.mxu0 %v1455
        %1506 = vmatpush.bf16.msra.mxu0 %v1453
        %1507 = vmatpush.bf16.msra.mxu0 %v1451
        %1508 = vmatpush.bf16.msra.mxu0 %v1449
        %1509 = vmatpush.bf16.msra.mxu0 %v1447
        %1510 = vmatpush.bf16.msra.mxu0 %v1445
        %1511 = vmatpush.bf16.msra.mxu0 %v1443
        %1512 = vmatpush.bf16.msra.mxu0 %v1441
        %1513 = vmatmul.bf16.gmra.mxu0 %v1341
        %v1514 = vpop.f32.mrf.mxu0
        %v1515 = vadd.f32 0.0, %v1514
        %v1516 = vpop.f32.mrf.mxu0
        %1517 = vdwg.mxu0
        %1518 = vmatpush.bf16.msra.mxu0 %v1471
        %1519 = vmatpush.bf16.msra.mxu0 %v1469
        %1520 = vmatpush.bf16.msra.mxu0 %v1467
        %1521 = vmatpush.bf16.msra.mxu0 %v1465
        %1522 = vmatpush.bf16.msra.mxu0 %v1463
        %1523 = vmatpush.bf16.msra.mxu0 %v1461
        %1524 = vmatpush.bf16.msra.mxu0 %v1459
        %1525 = vmatpush.bf16.msra.mxu0 %v1457
        %1526 = vmatmul.bf16.gmra.mxu0 %v1342
        %v1527 = vpop.f32.mrf.mxu0
        %v1528 = vadd.f32 %v1515, %v1527
        %v1529 = vpop.f32.mrf.mxu0
        %1530 = vdwg.mxu0
        %1531 = vmatpush.bf16.msra.mxu0 %v1456
        %1532 = vmatpush.bf16.msra.mxu0 %v1454
        %1533 = vmatpush.bf16.msra.mxu0 %v1452
        %1534 = vmatpush.bf16.msra.mxu0 %v1450
        %1535 = vmatpush.bf16.msra.mxu0 %v1448
        %1536 = vmatpush.bf16.msra.mxu0 %v1446
        %1537 = vmatpush.bf16.msra.mxu0 %v1444
        %1538 = vmatpush.bf16.msra.mxu0 %v1442
        %1539 = vmatmul.bf16.gmra.mxu0 %v1341
        %v1540 = vpop.f32.mrf.mxu0
        %v1541 = vadd.f32 0.0, %v1540
        %v1542 = vpop.f32.mrf.mxu0
        %1543 = vdwg.mxu0
        %1544 = vmatpush.bf16.msra.mxu0 %v1472
        %1545 = vmatpush.bf16.msra.mxu0 %v1470
        %1546 = vmatpush.bf16.msra.mxu0 %v1468
        %1547 = vmatpush.bf16.msra.mxu0 %v1466
        %1548 = vmatpush.bf16.msra.mxu0 %v1464
        %1549 = vmatpush.bf16.msra.mxu0 %v1462
        %1550 = vmatpush.bf16.msra.mxu0 %v1460
        %1551 = vmatpush.bf16.msra.mxu0 %v1458
        %1552 = vmatmul.bf16.gmra.mxu0 %v1342
        %v1553 = vpop.f32.mrf.mxu0
        %v1554 = vadd.f32 %v1541, %v1553
        %v1555 = vpop.f32.mrf.mxu0
        %1556 = vdwg.mxu0
        %v1557 = vadd.f32 %v435, %v1528
        %v1558 = vadd.f32 %v436, %v1554
        %v1559 = vld [vmem:[%s5] sm:$0x3]
        %v1560 = vmul.f32 %v1557, %v1557
        %v1561 = vmul.f32 %v1558, %v1558
        %v1562 = vadd.f32 %v1560, %v1561
        %1563 = vadd.xlane.f32.xlu0 %v1562
        %v1564 = vpop.xlane.xlu0 %1563
        %v1565 = vmul.f32 %v1564, %v449
        %v1566 = vadd.f32 %v1565, 1e-06
        %v1567 = vrsqrt.pop %v1566
        %v1568 = vmul.f32 %v1567, %v1566
        %v1569 = vmul.f32 %v1568, %v1567
        %v1570 = vmul.f32 0.5, %v1569
        %v1571 = vsub.f32 1.5, %v1570
        %v1572 = vmul.f32 %v1567, %v1571
        %vm1573 = vweird.f32 %v1566
        %vm1574 = vweird.f32 %v1567
        %vm1575 = vmor %vm1573, %vm1574
        %v1576 = vsel %vm1575, %v1567, %v1572
        %v1577 = vmul.f32 %v1557, %v1576
        %v1578 = vmul.f32 %v1558, %v1576
        %v1580 = vperm.slane %v1559, 0
        %v1581 = vperm.slane %v1559, 1
        %v1584 = vmul.f32 %v1577, %v1580
        %v1585 = vmul.f32 %v1578, %v1581
        %v1586 = vpack.c.bf16 %v1584, %v1584
        %v1587 = vpack.c.bf16 %v1585, %v1585
        %v1588 = vld [vmem:[#allocation11] sm:$0xff]
        %v1589 = vld [vmem:[#allocation11 + $0x8] sm:$0xff]
        %v1590 = vld [vmem:[#allocation11 + $0x10] sm:$0xff]
        %v1591 = vld [vmem:[#allocation11 + $0x18] sm:$0xff]
        %v1592 = vld [vmem:[#allocation11 + $0x20] sm:$0xff]
        %v1593 = vld [vmem:[#allocation11 + $0x28] sm:$0xff]
        %v1594 = vld [vmem:[#allocation11 + $0x30] sm:$0xff]
        %v1595 = vld [vmem:[#allocation11 + $0x38] sm:$0xff]
        %v1596 = vld [vmem:[#allocation11 + $0x40] sm:$0xff]
        %v1597 = vld [vmem:[#allocation11 + $0x48] sm:$0xff]
        %v1598 = vld [vmem:[#allocation11 + $0x50] sm:$0xff]
        %v1599 = vld [vmem:[#allocation11 + $0x58] sm:$0xff]
        %v1600 = vld [vmem:[#allocation11 + $0x60] sm:$0xff]
        %v1601 = vld [vmem:[#allocation11 + $0x68] sm:$0xff]
        %v1602 = vld [vmem:[#allocation11 + $0x70] sm:$0xff]
        %v1603 = vld [vmem:[#allocation11 + $0x78] sm:$0xff]
        %v1604 = vld [vmem:[#allocation11 + $0x80] sm:$0xff]
        %v1605 = vld [vmem:[#allocation11 + $0x88] sm:$0xff]
        %v1606 = vld [vmem:[#allocation11 + $0x90] sm:$0xff]
        %v1607 = vld [vmem:[#allocation11 + $0x98] sm:$0xff]
        %v1608 = vld [vmem:[#allocation11 + $0xa0] sm:$0xff]
        %v1609 = vld [vmem:[#allocation11 + $0xa8] sm:$0xff]
        %v1610 = vld [vmem:[#allocation11 + $0xb0] sm:$0xff]
        %v1611 = vld [vmem:[#allocation11 + $0xb8] sm:$0xff]
        %v1612 = vld [vmem:[#allocation11 + $0xc0] sm:$0xff]
        %v1613 = vld [vmem:[#allocation11 + $0xc8] sm:$0xff]
        %v1614 = vld [vmem:[#allocation11 + $0xd0] sm:$0xff]
        %v1615 = vld [vmem:[#allocation11 + $0xd8] sm:$0xff]
        %v1616 = vld [vmem:[#allocation11 + $0xe0] sm:$0xff]
        %v1617 = vld [vmem:[#allocation11 + $0xe8] sm:$0xff]
        %v1618 = vld [vmem:[#allocation11 + $0xf0] sm:$0xff]
        %v1619 = vld [vmem:[#allocation11 + $0xf8] sm:$0xff]
        %v1620 = vld [vmem:[#allocation11 + $0x100] sm:$0xff]
        %v1621 = vld [vmem:[#allocation11 + $0x108] sm:$0xff]
        %v1622 = vld [vmem:[#allocation11 + $0x110] sm:$0xff]
        %v1623 = vld [vmem:[#allocation11 + $0x118] sm:$0xff]
        %v1624 = vld [vmem:[#allocation11 + $0x120] sm:$0xff]
        %v1625 = vld [vmem:[#allocation11 + $0x128] sm:$0xff]
        %v1626 = vld [vmem:[#allocation11 + $0x130] sm:$0xff]
        %v1627 = vld [vmem:[#allocation11 + $0x138] sm:$0xff]
        %v1628 = vld [vmem:[#allocation11 + $0x140] sm:$0xff]
        %v1629 = vld [vmem:[#allocation11 + $0x148] sm:$0xff]
        %v1630 = vld [vmem:[#allocation11 + $0x150] sm:$0xff]
        %v1631 = vld [vmem:[#allocation11 + $0x158] sm:$0xff]
        %v1632 = vld [vmem:[#allocation11 + $0x160] sm:$0xff]
        %v1633 = vld [vmem:[#allocation11 + $0x168] sm:$0xff]
        %v1634 = vld [vmem:[#allocation11 + $0x170] sm:$0xff]
        %v1635 = vld [vmem:[#allocation11 + $0x178] sm:$0xff]
        %v1636 = vld [vmem:[#allocation11 + $0x180] sm:$0xff]
        %v1637 = vld [vmem:[#allocation11 + $0x188] sm:$0xff]
        %v1638 = vld [vmem:[#allocation11 + $0x190] sm:$0xff]
        %v1639 = vld [vmem:[#allocation11 + $0x198] sm:$0xff]
        %v1640 = vld [vmem:[#allocation11 + $0x1a0] sm:$0xff]
        %v1641 = vld [vmem:[#allocation11 + $0x1a8] sm:$0xff]
        %v1642 = vld [vmem:[#allocation11 + $0x1b0] sm:$0xff]
        %v1643 = vld [vmem:[#allocation11 + $0x1b8] sm:$0xff]
        %v1644 = vld [vmem:[#allocation11 + $0x1c0] sm:$0xff]
        %v1645 = vld [vmem:[#allocation11 + $0x1c8] sm:$0xff]
        %v1646 = vld [vmem:[#allocation11 + $0x1d0] sm:$0xff]
        %v1647 = vld [vmem:[#allocation11 + $0x1d8] sm:$0xff]
        %v1648 = vld [vmem:[#allocation11 + $0x1e0] sm:$0xff]
        %v1649 = vld [vmem:[#allocation11 + $0x1e8] sm:$0xff]
        %v1650 = vld [vmem:[#allocation11 + $0x1f0] sm:$0xff]
        %v1651 = vld [vmem:[#allocation11 + $0x1f8] sm:$0xff]
        %v1716 = vunpack.c.l.b16 %v1588
        %v1717 = vunpack.c.h.b16 %v1588
        %v1718 = vunpack.c.l.b16 %v1589
        %v1719 = vunpack.c.h.b16 %v1589
        %v1720 = vunpack.c.l.b16 %v1590
        %v1721 = vunpack.c.h.b16 %v1590
        %v1722 = vunpack.c.l.b16 %v1591
        %v1723 = vunpack.c.h.b16 %v1591
        %v1724 = vunpack.c.l.b16 %v1592
        %v1725 = vunpack.c.h.b16 %v1592
        %v1726 = vunpack.c.l.b16 %v1593
        %v1727 = vunpack.c.h.b16 %v1593
        %v1728 = vunpack.c.l.b16 %v1594
        %v1729 = vunpack.c.h.b16 %v1594
        %v1730 = vunpack.c.l.b16 %v1595
        %v1731 = vunpack.c.h.b16 %v1595
        %v1732 = vunpack.c.l.b16 %v1596
        %v1733 = vunpack.c.h.b16 %v1596
        %v1734 = vunpack.c.l.b16 %v1597
        %v1735 = vunpack.c.h.b16 %v1597
        %v1736 = vunpack.c.l.b16 %v1598
        %v1737 = vunpack.c.h.b16 %v1598
        %v1738 = vunpack.c.l.b16 %v1599
        %v1739 = vunpack.c.h.b16 %v1599
        %v1740 = vunpack.c.l.b16 %v1600
        %v1741 = vunpack.c.h.b16 %v1600
        %v1742 = vunpack.c.l.b16 %v1601
        %v1743 = vunpack.c.h.b16 %v1601
        %v1744 = vunpack.c.l.b16 %v1602
        %v1745 = vunpack.c.h.b16 %v1602
        %v1746 = vunpack.c.l.b16 %v1603
        %v1747 = vunpack.c.h.b16 %v1603
        %v1748 = vunpack.c.l.b16 %v1604
        %v1749 = vunpack.c.h.b16 %v1604
        %v1750 = vunpack.c.l.b16 %v1605
        %v1751 = vunpack.c.h.b16 %v1605
        %v1752 = vunpack.c.l.b16 %v1606
        %v1753 = vunpack.c.h.b16 %v1606
        %v1754 = vunpack.c.l.b16 %v1607
        %v1755 = vunpack.c.h.b16 %v1607
        %v1756 = vunpack.c.l.b16 %v1608
        %v1757 = vunpack.c.h.b16 %v1608
        %v1758 = vunpack.c.l.b16 %v1609
        %v1759 = vunpack.c.h.b16 %v1609
        %v1760 = vunpack.c.l.b16 %v1610
        %v1761 = vunpack.c.h.b16 %v1610
        %v1762 = vunpack.c.l.b16 %v1611
        %v1763 = vunpack.c.h.b16 %v1611
        %v1764 = vunpack.c.l.b16 %v1612
        %v1765 = vunpack.c.h.b16 %v1612
        %v1766 = vunpack.c.l.b16 %v1613
        %v1767 = vunpack.c.h.b16 %v1613
        %v1768 = vunpack.c.l.b16 %v1614
        %v1769 = vunpack.c.h.b16 %v1614
        %v1770 = vunpack.c.l.b16 %v1615
        %v1771 = vunpack.c.h.b16 %v1615
        %v1772 = vunpack.c.l.b16 %v1616
        %v1773 = vunpack.c.h.b16 %v1616
        %v1774 = vunpack.c.l.b16 %v1617
        %v1775 = vunpack.c.h.b16 %v1617
        %v1776 = vunpack.c.l.b16 %v1618
        %v1777 = vunpack.c.h.b16 %v1618
        %v1778 = vunpack.c.l.b16 %v1619
        %v1779 = vunpack.c.h.b16 %v1619
        %v1780 = vunpack.c.l.b16 %v1620
        %v1781 = vunpack.c.h.b16 %v1620
        %v1782 = vunpack.c.l.b16 %v1621
        %v1783 = vunpack.c.h.b16 %v1621
        %v1784 = vunpack.c.l.b16 %v1622
        %v1785 = vunpack.c.h.b16 %v1622
        %v1786 = vunpack.c.l.b16 %v1623
        %v1787 = vunpack.c.h.b16 %v1623
        %v1788 = vunpack.c.l.b16 %v1624
        %v1789 = vunpack.c.h.b16 %v1624
        %v1790 = vunpack.c.l.b16 %v1625
        %v1791 = vunpack.c.h.b16 %v1625
        %v1792 = vunpack.c.l.b16 %v1626
        %v1793 = vunpack.c.h.b16 %v1626
        %v1794 = vunpack.c.l.b16 %v1627
        %v1795 = vunpack.c.h.b16 %v1627
        %v1796 = vunpack.c.l.b16 %v1628
        %v1797 = vunpack.c.h.b16 %v1628
        %v1798 = vunpack.c.l.b16 %v1629
        %v1799 = vunpack.c.h.b16 %v1629
        %v1800 = vunpack.c.l.b16 %v1630
        %v1801 = vunpack.c.h.b16 %v1630
        %v1802 = vunpack.c.l.b16 %v1631
        %v1803 = vunpack.c.h.b16 %v1631
        %v1804 = vunpack.c.l.b16 %v1632
        %v1805 = vunpack.c.h.b16 %v1632
        %v1806 = vunpack.c.l.b16 %v1633
        %v1807 = vunpack.c.h.b16 %v1633
        %v1808 = vunpack.c.l.b16 %v1634
        %v1809 = vunpack.c.h.b16 %v1634
        %v1810 = vunpack.c.l.b16 %v1635
        %v1811 = vunpack.c.h.b16 %v1635
        %v1812 = vunpack.c.l.b16 %v1636
        %v1813 = vunpack.c.h.b16 %v1636
        %v1814 = vunpack.c.l.b16 %v1637
        %v1815 = vunpack.c.h.b16 %v1637
        %v1816 = vunpack.c.l.b16 %v1638
        %v1817 = vunpack.c.h.b16 %v1638
        %v1818 = vunpack.c.l.b16 %v1639
        %v1819 = vunpack.c.h.b16 %v1639
        %v1820 = vunpack.c.l.b16 %v1640
        %v1821 = vunpack.c.h.b16 %v1640
        %v1822 = vunpack.c.l.b16 %v1641
        %v1823 = vunpack.c.h.b16 %v1641
        %v1824 = vunpack.c.l.b16 %v1642
        %v1825 = vunpack.c.h.b16 %v1642
        %v1826 = vunpack.c.l.b16 %v1643
        %v1827 = vunpack.c.h.b16 %v1643
        %v1828 = vunpack.c.l.b16 %v1644
        %v1829 = vunpack.c.h.b16 %v1644
        %v1830 = vunpack.c.l.b16 %v1645
        %v1831 = vunpack.c.h.b16 %v1645
        %v1832 = vunpack.c.l.b16 %v1646
        %v1833 = vunpack.c.h.b16 %v1646
        %v1834 = vunpack.c.l.b16 %v1647
        %v1835 = vunpack.c.h.b16 %v1647
        %v1836 = vunpack.c.l.b16 %v1648
        %v1837 = vunpack.c.h.b16 %v1648
        %v1838 = vunpack.c.l.b16 %v1649
        %v1839 = vunpack.c.h.b16 %v1649
        %v1840 = vunpack.c.l.b16 %v1650
        %v1841 = vunpack.c.h.b16 %v1650
        %v1842 = vunpack.c.l.b16 %v1651
        %v1843 = vunpack.c.h.b16 %v1651
        %v1844 = vpack.c.b16 %v1720, %v1716
        %v1845 = vpack.c.b16 %v1721, %v1717
        %v1846 = vpack.c.b16 %v1722, %v1718
        %v1847 = vpack.c.b16 %v1723, %v1719
        %v1848 = vpack.c.b16 %v1728, %v1724
        %v1849 = vpack.c.b16 %v1729, %v1725
        %v1850 = vpack.c.b16 %v1730, %v1726
        %v1851 = vpack.c.b16 %v1731, %v1727
        %v1852 = vpack.c.b16 %v1736, %v1732
        %v1853 = vpack.c.b16 %v1737, %v1733
        %v1854 = vpack.c.b16 %v1738, %v1734
        %v1855 = vpack.c.b16 %v1739, %v1735
        %v1856 = vpack.c.b16 %v1744, %v1740
        %v1857 = vpack.c.b16 %v1745, %v1741
        %v1858 = vpack.c.b16 %v1746, %v1742
        %v1859 = vpack.c.b16 %v1747, %v1743
        %v1860 = vpack.c.b16 %v1752, %v1748
        %v1861 = vpack.c.b16 %v1753, %v1749
        %v1862 = vpack.c.b16 %v1754, %v1750
        %v1863 = vpack.c.b16 %v1755, %v1751
        %v1864 = vpack.c.b16 %v1760, %v1756
        %v1865 = vpack.c.b16 %v1761, %v1757
        %v1866 = vpack.c.b16 %v1762, %v1758
        %v1867 = vpack.c.b16 %v1763, %v1759
        %v1868 = vpack.c.b16 %v1768, %v1764
        %v1869 = vpack.c.b16 %v1769, %v1765
        %v1870 = vpack.c.b16 %v1770, %v1766
        %v1871 = vpack.c.b16 %v1771, %v1767
        %v1872 = vpack.c.b16 %v1776, %v1772
        %v1873 = vpack.c.b16 %v1777, %v1773
        %v1874 = vpack.c.b16 %v1778, %v1774
        %v1875 = vpack.c.b16 %v1779, %v1775
        %v1876 = vpack.c.b16 %v1784, %v1780
        %v1877 = vpack.c.b16 %v1785, %v1781
        %v1878 = vpack.c.b16 %v1786, %v1782
        %v1879 = vpack.c.b16 %v1787, %v1783
        %v1880 = vpack.c.b16 %v1792, %v1788
        %v1881 = vpack.c.b16 %v1793, %v1789
        %v1882 = vpack.c.b16 %v1794, %v1790
        %v1883 = vpack.c.b16 %v1795, %v1791
        %v1884 = vpack.c.b16 %v1800, %v1796
        %v1885 = vpack.c.b16 %v1801, %v1797
        %v1886 = vpack.c.b16 %v1802, %v1798
        %v1887 = vpack.c.b16 %v1803, %v1799
        %v1888 = vpack.c.b16 %v1808, %v1804
        %v1889 = vpack.c.b16 %v1809, %v1805
        %v1890 = vpack.c.b16 %v1810, %v1806
        %v1891 = vpack.c.b16 %v1811, %v1807
        %v1892 = vpack.c.b16 %v1816, %v1812
        %v1893 = vpack.c.b16 %v1817, %v1813
        %v1894 = vpack.c.b16 %v1818, %v1814
        %v1895 = vpack.c.b16 %v1819, %v1815
        %v1896 = vpack.c.b16 %v1824, %v1820
        %v1897 = vpack.c.b16 %v1825, %v1821
        %v1898 = vpack.c.b16 %v1826, %v1822
        %v1899 = vpack.c.b16 %v1827, %v1823
        %v1900 = vpack.c.b16 %v1832, %v1828
        %v1901 = vpack.c.b16 %v1833, %v1829
        %v1902 = vpack.c.b16 %v1834, %v1830
        %v1903 = vpack.c.b16 %v1835, %v1831
        %v1904 = vpack.c.b16 %v1840, %v1836
        %v1905 = vpack.c.b16 %v1841, %v1837
        %v1906 = vpack.c.b16 %v1842, %v1838
        %v1907 = vpack.c.b16 %v1843, %v1839
        %1972 = vmatpush.bf16.msra.mxu0 %v1872
        %1973 = vmatpush.bf16.msra.mxu0 %v1868
        %1974 = vmatpush.bf16.msra.mxu0 %v1864
        %1975 = vmatpush.bf16.msra.mxu0 %v1860
        %1976 = vmatpush.bf16.msra.mxu0 %v1856
        %1977 = vmatpush.bf16.msra.mxu0 %v1852
        %1978 = vmatpush.bf16.msra.mxu0 %v1848
        %1979 = vmatpush.bf16.msra.mxu0 %v1844
        %1980 = vmatmul.bf16.gmra.mxu0 %v1586
        %v1981 = vpop.f32.mrf.mxu0
        %v1982 = vadd.f32 0.0, %v1981
        %v1983 = vpop.f32.mrf.mxu0
        %1984 = vdwg.mxu0
        %1985 = vmatpush.bf16.msra.mxu0 %v1904
        %1986 = vmatpush.bf16.msra.mxu0 %v1900
        %1987 = vmatpush.bf16.msra.mxu0 %v1896
        %1988 = vmatpush.bf16.msra.mxu0 %v1892
        %1989 = vmatpush.bf16.msra.mxu0 %v1888
        %1990 = vmatpush.bf16.msra.mxu0 %v1884
        %1991 = vmatpush.bf16.msra.mxu0 %v1880
        %1992 = vmatpush.bf16.msra.mxu0 %v1876
        %1993 = vmatmul.bf16.gmra.mxu0 %v1587
        %v1994 = vpop.f32.mrf.mxu0
        %v1995 = vadd.f32 %v1982, %v1994
        %v1996 = vpop.f32.mrf.mxu0
        %1997 = vdwg.mxu0
        %1998 = vmatpush.bf16.msra.mxu0 %v1873
        %1999 = vmatpush.bf16.msra.mxu0 %v1869
        %2000 = vmatpush.bf16.msra.mxu0 %v1865
        %2001 = vmatpush.bf16.msra.mxu0 %v1861
        %2002 = vmatpush.bf16.msra.mxu0 %v1857
        %2003 = vmatpush.bf16.msra.mxu0 %v1853
        %2004 = vmatpush.bf16.msra.mxu0 %v1849
        %2005 = vmatpush.bf16.msra.mxu0 %v1845
        %2006 = vmatmul.bf16.gmra.mxu0 %v1586
        %v2007 = vpop.f32.mrf.mxu0
        %v2008 = vadd.f32 0.0, %v2007
        %v2009 = vpop.f32.mrf.mxu0
        %2010 = vdwg.mxu0
        %2011 = vmatpush.bf16.msra.mxu0 %v1905
        %2012 = vmatpush.bf16.msra.mxu0 %v1901
        %2013 = vmatpush.bf16.msra.mxu0 %v1897
        %2014 = vmatpush.bf16.msra.mxu0 %v1893
        %2015 = vmatpush.bf16.msra.mxu0 %v1889
        %2016 = vmatpush.bf16.msra.mxu0 %v1885
        %2017 = vmatpush.bf16.msra.mxu0 %v1881
        %2018 = vmatpush.bf16.msra.mxu0 %v1877
        %2019 = vmatmul.bf16.gmra.mxu0 %v1587
        %v2020 = vpop.f32.mrf.mxu0
        %v2021 = vadd.f32 %v2008, %v2020
        %v2022 = vpop.f32.mrf.mxu0
        %2023 = vdwg.mxu0
        %2024 = vmatpush.bf16.msra.mxu0 %v1874
        %2025 = vmatpush.bf16.msra.mxu0 %v1870
        %2026 = vmatpush.bf16.msra.mxu0 %v1866
        %2027 = vmatpush.bf16.msra.mxu0 %v1862
        %2028 = vmatpush.bf16.msra.mxu0 %v1858
        %2029 = vmatpush.bf16.msra.mxu0 %v1854
        %2030 = vmatpush.bf16.msra.mxu0 %v1850
        %2031 = vmatpush.bf16.msra.mxu0 %v1846
        %2032 = vmatmul.bf16.gmra.mxu0 %v1586
        %v2033 = vpop.f32.mrf.mxu0
        %v2034 = vadd.f32 0.0, %v2033
        %v2035 = vpop.f32.mrf.mxu0
        %2036 = vdwg.mxu0
        %2037 = vmatpush.bf16.msra.mxu0 %v1906
        %2038 = vmatpush.bf16.msra.mxu0 %v1902
        %2039 = vmatpush.bf16.msra.mxu0 %v1898
        %2040 = vmatpush.bf16.msra.mxu0 %v1894
        %2041 = vmatpush.bf16.msra.mxu0 %v1890
        %2042 = vmatpush.bf16.msra.mxu0 %v1886
        %2043 = vmatpush.bf16.msra.mxu0 %v1882
        %2044 = vmatpush.bf16.msra.mxu0 %v1878
        %2045 = vmatmul.bf16.gmra.mxu0 %v1587
        %v2046 = vpop.f32.mrf.mxu0
        %v2047 = vadd.f32 %v2034, %v2046
        %v2048 = vpop.f32.mrf.mxu0
        %2049 = vdwg.mxu0
        %2050 = vmatpush.bf16.msra.mxu0 %v1875
        %2051 = vmatpush.bf16.msra.mxu0 %v1871
        %2052 = vmatpush.bf16.msra.mxu0 %v1867
        %2053 = vmatpush.bf16.msra.mxu0 %v1863
        %2054 = vmatpush.bf16.msra.mxu0 %v1859
        %2055 = vmatpush.bf16.msra.mxu0 %v1855
        %2056 = vmatpush.bf16.msra.mxu0 %v1851
        %2057 = vmatpush.bf16.msra.mxu0 %v1847
        %2058 = vmatmul.bf16.gmra.mxu0 %v1586
        %v2059 = vpop.f32.mrf.mxu0
        %v2060 = vadd.f32 0.0, %v2059
        %v2061 = vpop.f32.mrf.mxu0
        %2062 = vdwg.mxu0
        %2063 = vmatpush.bf16.msra.mxu0 %v1907
        %2064 = vmatpush.bf16.msra.mxu0 %v1903
        %2065 = vmatpush.bf16.msra.mxu0 %v1899
        %2066 = vmatpush.bf16.msra.mxu0 %v1895
        %2067 = vmatpush.bf16.msra.mxu0 %v1891
        %2068 = vmatpush.bf16.msra.mxu0 %v1887
        %2069 = vmatpush.bf16.msra.mxu0 %v1883
        %2070 = vmatpush.bf16.msra.mxu0 %v1879
        %2071 = vmatmul.bf16.gmra.mxu0 %v1587
        %v2072 = vpop.f32.mrf.mxu0
        %v2073 = vadd.f32 %v2060, %v2072
        %v2074 = vpop.f32.mrf.mxu0
        %2075 = vdwg.mxu0
        %v2076 = vxor.u32 %v1995, 2147483648
        %v2077 = vxor.u32 %v2021, 2147483648
        %v2078 = vmul.f32 %v2076, 1.442695
        %v2079 = vpow.pop %v2078
        %v2080 = vmul.f32 %v2077, 1.442695
        %v2081 = vpow.pop %v2080
        %v2082 = vadd.f32 %v2079, 1.0
        %v2083 = vadd.f32 %v2081, 1.0
        %v2084 = vrcp.pop %v2082
        %v2085 = vmul.f32 %v2082, %v2084
        %v2086 = vsub.f32 1.0, %v2085
        %v2087 = vmul.f32 %v2084, %v2086
        %v2088 = vadd.f32 %v2084, %v2087
        %vm2089 = vweird.f32 %v2082
        %vm2090 = vweird.f32 %v2084
        %vm2091 = vmor %vm2089, %vm2090
        %v2092 = vsel %vm2091, %v2084, %v2088
        %v2093 = vand.u32 2147483647, %v2082
        %vm2094 = vcmp.eq.f32.partialorder %v2093, 8.507059e+37
        %v2095 = vand.u32 %v2082, 2147483648
        %v2096 = vor.u32 1.1754944e-38, %v2095
        %v2097 = vsel %vm2094, %v2096, %v2092
        %v2098 = vmul.f32 1.0, %v2097
        %v2099 = vrcp.pop %v2083
        %v2100 = vmul.f32 %v2083, %v2099
        %v2101 = vsub.f32 1.0, %v2100
        %v2102 = vmul.f32 %v2099, %v2101
        %v2103 = vadd.f32 %v2099, %v2102
        %vm2104 = vweird.f32 %v2083
        %vm2105 = vweird.f32 %v2099
        %vm2106 = vmor %vm2104, %vm2105
        %v2107 = vsel %vm2106, %v2099, %v2103
        %v2108 = vand.u32 2147483647, %v2083
        %vm2109 = vcmp.eq.f32.partialorder %v2108, 8.507059e+37
        %v2110 = vand.u32 %v2083, 2147483648
        %v2111 = vor.u32 1.1754944e-38, %v2110
        %v2112 = vsel %vm2109, %v2111, %v2107
        %v2113 = vmul.f32 1.0, %v2112
        %v2114 = vmul.f32 %v1995, %v2098
        %v2115 = vmul.f32 %v2021, %v2113
        %v2116 = vmul.f32 %v2114, %v2047
        %v2117 = vmul.f32 %v2115, %v2073
        %v2118 = vpack.c.bf16 %v2116, %v2116
        %v2119 = vpack.c.bf16 %v2117, %v2117
        %v2120 = vld [vmem:[#allocation12] sm:$0xff]
        %v2121 = vld [vmem:[#allocation12 + $0x8] sm:$0xff]
        %v2122 = vld [vmem:[#allocation12 + $0x10] sm:$0xff]
        %v2123 = vld [vmem:[#allocation12 + $0x18] sm:$0xff]
        %v2124 = vld [vmem:[#allocation12 + $0x20] sm:$0xff]
        %v2125 = vld [vmem:[#allocation12 + $0x28] sm:$0xff]
        %v2126 = vld [vmem:[#allocation12 + $0x30] sm:$0xff]
        %v2127 = vld [vmem:[#allocation12 + $0x38] sm:$0xff]
        %v2128 = vld [vmem:[#allocation12 + $0x40] sm:$0xff]
        %v2129 = vld [vmem:[#allocation12 + $0x48] sm:$0xff]
        %v2130 = vld [vmem:[#allocation12 + $0x50] sm:$0xff]
        %v2131 = vld [vmem:[#allocation12 + $0x58] sm:$0xff]
        %v2132 = vld [vmem:[#allocation12 + $0x60] sm:$0xff]
        %v2133 = vld [vmem:[#allocation12 + $0x68] sm:$0xff]
        %v2134 = vld [vmem:[#allocation12 + $0x70] sm:$0xff]
        %v2135 = vld [vmem:[#allocation12 + $0x78] sm:$0xff]
        %v2136 = vld [vmem:[#allocation12 + $0x80] sm:$0xff]
        %v2137 = vld [vmem:[#allocation12 + $0x88] sm:$0xff]
        %v2138 = vld [vmem:[#allocation12 + $0x90] sm:$0xff]
        %v2139 = vld [vmem:[#allocation12 + $0x98] sm:$0xff]
        %v2140 = vld [vmem:[#allocation12 + $0xa0] sm:$0xff]
        %v2141 = vld [vmem:[#allocation12 + $0xa8] sm:$0xff]
        %v2142 = vld [vmem:[#allocation12 + $0xb0] sm:$0xff]
        %v2143 = vld [vmem:[#allocation12 + $0xb8] sm:$0xff]
        %v2144 = vld [vmem:[#allocation12 + $0xc0] sm:$0xff]
        %v2145 = vld [vmem:[#allocation12 + $0xc8] sm:$0xff]
        %v2146 = vld [vmem:[#allocation12 + $0xd0] sm:$0xff]
        %v2147 = vld [vmem:[#allocation12 + $0xd8] sm:$0xff]
        %v2148 = vld [vmem:[#allocation12 + $0xe0] sm:$0xff]
        %v2149 = vld [vmem:[#allocation12 + $0xe8] sm:$0xff]
        %v2150 = vld [vmem:[#allocation12 + $0xf0] sm:$0xff]
        %v2151 = vld [vmem:[#allocation12 + $0xf8] sm:$0xff]
        %v2184 = vunpack.c.l.b16 %v2120
        %v2185 = vunpack.c.h.b16 %v2120
        %v2186 = vunpack.c.l.b16 %v2121
        %v2187 = vunpack.c.h.b16 %v2121
        %v2188 = vunpack.c.l.b16 %v2122
        %v2189 = vunpack.c.h.b16 %v2122
        %v2190 = vunpack.c.l.b16 %v2123
        %v2191 = vunpack.c.h.b16 %v2123
        %v2192 = vunpack.c.l.b16 %v2124
        %v2193 = vunpack.c.h.b16 %v2124
        %v2194 = vunpack.c.l.b16 %v2125
        %v2195 = vunpack.c.h.b16 %v2125
        %v2196 = vunpack.c.l.b16 %v2126
        %v2197 = vunpack.c.h.b16 %v2126
        %v2198 = vunpack.c.l.b16 %v2127
        %v2199 = vunpack.c.h.b16 %v2127
        %v2200 = vunpack.c.l.b16 %v2128
        %v2201 = vunpack.c.h.b16 %v2128
        %v2202 = vunpack.c.l.b16 %v2129
        %v2203 = vunpack.c.h.b16 %v2129
        %v2204 = vunpack.c.l.b16 %v2130
        %v2205 = vunpack.c.h.b16 %v2130
        %v2206 = vunpack.c.l.b16 %v2131
        %v2207 = vunpack.c.h.b16 %v2131
        %v2208 = vunpack.c.l.b16 %v2132
        %v2209 = vunpack.c.h.b16 %v2132
        %v2210 = vunpack.c.l.b16 %v2133
        %v2211 = vunpack.c.h.b16 %v2133
        %v2212 = vunpack.c.l.b16 %v2134
        %v2213 = vunpack.c.h.b16 %v2134
        %v2214 = vunpack.c.l.b16 %v2135
        %v2215 = vunpack.c.h.b16 %v2135
        %v2216 = vunpack.c.l.b16 %v2136
        %v2217 = vunpack.c.h.b16 %v2136
        %v2218 = vunpack.c.l.b16 %v2137
        %v2219 = vunpack.c.h.b16 %v2137
        %v2220 = vunpack.c.l.b16 %v2138
        %v2221 = vunpack.c.h.b16 %v2138
        %v2222 = vunpack.c.l.b16 %v2139
        %v2223 = vunpack.c.h.b16 %v2139
        %v2224 = vunpack.c.l.b16 %v2140
        %v2225 = vunpack.c.h.b16 %v2140
        %v2226 = vunpack.c.l.b16 %v2141
        %v2227 = vunpack.c.h.b16 %v2141
        %v2228 = vunpack.c.l.b16 %v2142
        %v2229 = vunpack.c.h.b16 %v2142
        %v2230 = vunpack.c.l.b16 %v2143
        %v2231 = vunpack.c.h.b16 %v2143
        %v2232 = vunpack.c.l.b16 %v2144
        %v2233 = vunpack.c.h.b16 %v2144
        %v2234 = vunpack.c.l.b16 %v2145
        %v2235 = vunpack.c.h.b16 %v2145
        %v2236 = vunpack.c.l.b16 %v2146
        %v2237 = vunpack.c.h.b16 %v2146
        %v2238 = vunpack.c.l.b16 %v2147
        %v2239 = vunpack.c.h.b16 %v2147
        %v2240 = vunpack.c.l.b16 %v2148
        %v2241 = vunpack.c.h.b16 %v2148
        %v2242 = vunpack.c.l.b16 %v2149
        %v2243 = vunpack.c.h.b16 %v2149
        %v2244 = vunpack.c.l.b16 %v2150
        %v2245 = vunpack.c.h.b16 %v2150
        %v2246 = vunpack.c.l.b16 %v2151
        %v2247 = vunpack.c.h.b16 %v2151
        %v2248 = vpack.c.b16 %v2186, %v2184
        %v2249 = vpack.c.b16 %v2187, %v2185
        %v2250 = vpack.c.b16 %v2190, %v2188
        %v2251 = vpack.c.b16 %v2191, %v2189
        %v2252 = vpack.c.b16 %v2194, %v2192
        %v2253 = vpack.c.b16 %v2195, %v2193
        %v2254 = vpack.c.b16 %v2198, %v2196
        %v2255 = vpack.c.b16 %v2199, %v2197
        %v2256 = vpack.c.b16 %v2202, %v2200
        %v2257 = vpack.c.b16 %v2203, %v2201
        %v2258 = vpack.c.b16 %v2206, %v2204
        %v2259 = vpack.c.b16 %v2207, %v2205
        %v2260 = vpack.c.b16 %v2210, %v2208
        %v2261 = vpack.c.b16 %v2211, %v2209
        %v2262 = vpack.c.b16 %v2214, %v2212
        %v2263 = vpack.c.b16 %v2215, %v2213
        %v2264 = vpack.c.b16 %v2218, %v2216
        %v2265 = vpack.c.b16 %v2219, %v2217
        %v2266 = vpack.c.b16 %v2222, %v2220
        %v2267 = vpack.c.b16 %v2223, %v2221
        %v2268 = vpack.c.b16 %v2226, %v2224
        %v2269 = vpack.c.b16 %v2227, %v2225
        %v2270 = vpack.c.b16 %v2230, %v2228
        %v2271 = vpack.c.b16 %v2231, %v2229
        %v2272 = vpack.c.b16 %v2234, %v2232
        %v2273 = vpack.c.b16 %v2235, %v2233
        %v2274 = vpack.c.b16 %v2238, %v2236
        %v2275 = vpack.c.b16 %v2239, %v2237
        %v2276 = vpack.c.b16 %v2242, %v2240
        %v2277 = vpack.c.b16 %v2243, %v2241
        %v2278 = vpack.c.b16 %v2246, %v2244
        %v2279 = vpack.c.b16 %v2247, %v2245
        %2312 = vmatpush.bf16.msra.mxu0 %v2262
        %2313 = vmatpush.bf16.msra.mxu0 %v2260
        %2314 = vmatpush.bf16.msra.mxu0 %v2258
        %2315 = vmatpush.bf16.msra.mxu0 %v2256
        %2316 = vmatpush.bf16.msra.mxu0 %v2254
        %2317 = vmatpush.bf16.msra.mxu0 %v2252
        %2318 = vmatpush.bf16.msra.mxu0 %v2250
        %2319 = vmatpush.bf16.msra.mxu0 %v2248
        %2320 = vmatmul.bf16.gmra.mxu0 %v2118
        %v2321 = vpop.f32.mrf.mxu0
        %v2322 = vadd.f32 0.0, %v2321
        %v2323 = vpop.f32.mrf.mxu0
        %2324 = vdwg.mxu0
        %2325 = vmatpush.bf16.msra.mxu0 %v2278
        %2326 = vmatpush.bf16.msra.mxu0 %v2276
        %2327 = vmatpush.bf16.msra.mxu0 %v2274
        %2328 = vmatpush.bf16.msra.mxu0 %v2272
        %2329 = vmatpush.bf16.msra.mxu0 %v2270
        %2330 = vmatpush.bf16.msra.mxu0 %v2268
        %2331 = vmatpush.bf16.msra.mxu0 %v2266
        %2332 = vmatpush.bf16.msra.mxu0 %v2264
        %2333 = vmatmul.bf16.gmra.mxu0 %v2119
        %v2334 = vpop.f32.mrf.mxu0
        %v2335 = vadd.f32 %v2322, %v2334
        %v2336 = vpop.f32.mrf.mxu0
        %2337 = vdwg.mxu0
        %2338 = vmatpush.bf16.msra.mxu0 %v2263
        %2339 = vmatpush.bf16.msra.mxu0 %v2261
        %2340 = vmatpush.bf16.msra.mxu0 %v2259
        %2341 = vmatpush.bf16.msra.mxu0 %v2257
        %2342 = vmatpush.bf16.msra.mxu0 %v2255
        %2343 = vmatpush.bf16.msra.mxu0 %v2253
        %2344 = vmatpush.bf16.msra.mxu0 %v2251
        %2345 = vmatpush.bf16.msra.mxu0 %v2249
        %2346 = vmatmul.bf16.gmra.mxu0 %v2118
        %v2347 = vpop.f32.mrf.mxu0
        %v2348 = vadd.f32 0.0, %v2347
        %v2349 = vpop.f32.mrf.mxu0
        %2350 = vdwg.mxu0
        %2351 = vmatpush.bf16.msra.mxu0 %v2279
        %2352 = vmatpush.bf16.msra.mxu0 %v2277
        %2353 = vmatpush.bf16.msra.mxu0 %v2275
        %2354 = vmatpush.bf16.msra.mxu0 %v2273
        %2355 = vmatpush.bf16.msra.mxu0 %v2271
        %2356 = vmatpush.bf16.msra.mxu0 %v2269
        %2357 = vmatpush.bf16.msra.mxu0 %v2267
        %2358 = vmatpush.bf16.msra.mxu0 %v2265
        %2359 = vmatmul.bf16.gmra.mxu0 %v2119
        %v2360 = vpop.f32.mrf.mxu0
        %v2361 = vadd.f32 %v2348, %v2360
        %v2362 = vpop.f32.mrf.mxu0
        %2363 = vdwg.mxu0
        %v2364 = vadd.f32 %v1557, %v2335
        %v2365 = vadd.f32 %v1558, %v2361
        %2366 = vst [vmem:[%s429] sm:$0xff] %v2364
        %2367 = vst [vmem:[%s429 + $0x8] sm:$0xff] %v2365
        %s2368 = sand.u32 %s216, 1
        %s2369 = scalar_lea.sflag [#allocation5], %s2368
        %s2370 = sand.u32 %s216, 1
        %s2371 = smul.addr %s2370, 16
        %s2372 = scalar_lea.vmem [#allocation14], %s2371
        // Predicated region
        $region77: #{tpu_custom_call.1} parent=51 // pred_check
          %p2373 = pneg %p226
        $region78: #{tpu_custom_call.1} parent=51 // pred_check_branch
          %2375 = sbr.rel (%p2373) target = $region80
        $region79: #{tpu_custom_call.1} parent=51 // pred_region
          %2377 = vsyncadd %s2369, 0
          %s2378 = smul.addr %s30, 2
          %s2379 = smul.addr %s2378, 8
          %s2380 = scalar_lea.hbm %s8, %s2379
          %s2382 = sshll.u32 %s2372, 4
          %s2383 = int_to_ptr.vmem [resolvable:$true] %s2382
          %s2384 = sshll.u32 %s2380, 4
          %s2385 = int_to_ptr.hbm [resolvable:$true] %s2384
          %2387 = dma.vmem_to_hbm [thread:$0]  %s2383, 256, %s2385, %s2369
        $region80: #{tpu_custom_call.1} parent=51 // pred_fallthru
          _
      $region52: #{tpu_custom_call.1} parent=5 // pred_fallthru
        _
      %p2388 = scmp.le.s32.totalorder 2, %s25
      // Predicated region
      $region81: #{tpu_custom_call.1} parent=5 // pred_check
        %p2389 = pneg %p2388
      $region82: #{tpu_custom_call.1} parent=5 // pred_check_branch
        %2391 = sbr.rel (%p2389) target = $region84
      $region83: #{tpu_custom_call.1} parent=5 // pred_region
        %s2392 = ssub.s32 %s25, 2
        // Predicated region
        $region85: #{tpu_custom_call.1} parent=83 // pred_check
          %p2393 = pneg %p232
        $region86: #{tpu_custom_call.1} parent=83 // pred_check_branch
          %2395 = sbr.rel (%p2393) target = $region88
        $region87: #{tpu_custom_call.1} parent=83 // pred_region
          %s2396 = sand.u32 %s217, 1
          %s2397 = scalar_lea.sflag [#allocation5], %s2396
          %s2398 = sand.u32 %s217, 1
          %s2399 = smul.addr %s2398, 16
          %s2400 = scalar_lea.vmem [#allocation14], %s2399
          %2402 = dma.done %s2397, 256
        $region88: #{tpu_custom_call.1} parent=83 // pred_fallthru
          _
      $region84: #{tpu_custom_call.1} parent=5 // pred_fallthru
        _
    $region6: #{tpu_custom_call.1} parent=1 // loop_footer
      %s29 = sadd.s32 1, %s25
    $region7: #{tpu_custom_call.1} parent=1 // loop_footer_branch
      %24 = sbr.rel target = $region3
    $region8: #{tpu_custom_call.1} parent=1 // loop_exit
      _
    %2403 = vsyncpa [#allocation4], 1
    %s2404 = scalar_lea.sflag [#allocation4], 1
    %2405 = vsyncpa %s2404, 1
    %2406 = vsyncpa [#allocation7], 1
    %s2407 = scalar_lea.sflag [#allocation7], 1
    %2408 = vsyncpa %s2407, 1
    %2409 = vsyncpa [#allocation10], 1
    %2410 = vsyncpa [#allocation13], 1
    %2411 = vsyncpa [#allocation5], 1
    %s2412 = scalar_lea.sflag [#allocation5], 1
    %2413 = vsyncpa %s2412, 1

</llo_original>
